<compile_context>
chip_gen: v6e
topology: v6e:2x2x1
jax: 0.10.0
libtpu: 0.0.40
codegen_flags: <defaults>
</compile_context>

<pallas_src>
import functools

import jax
import jax.numpy as jnp
from jax import lax
from jax.experimental import pallas as pl
from jax.experimental.pallas import tpu as pltpu


_VMEM = pl.BlockSpec(memory_space=pltpu.MemorySpace.VMEM)


def _round_up(n, m):
    return ((n + m - 1) // m) * m


# ---------------------------------------------------------------------------
# Fused Pallas kernel: all LSTM layers (wavefront) + FC head
# ---------------------------------------------------------------------------
def fused_lstm_classifier_kernel(x_ref, wih0_ref, whh0_ref, b0_ref, wcat_ref,
                                 bl_ref, wfc_ref, bfc_ref, logits_ref,
                                 xproj_ref, *, T, BP, L, H):
    """Fused multi-layer LSTM + Linear.

    x_ref     : [T*BP, FP]          padded, time-major, flattened input
    wih0_ref  : [FP, 4H]            layer-0 W_ih^T (rows padded D -> FP)
    whh0_ref  : [H, 4H]             layer-0 W_hh^T
    b0_ref    : [1, 4H]             layer-0 fused bias b_ih + b_hh
    wcat_ref  : [max(L-1,1), 2H, 4H] layers>0: [W_ih^T ; W_hh^T] stacked
    bl_ref    : [max(L-1,1), 1, 4H]  layers>0 fused bias
    wfc_ref   : [H, CP]             FC weight^T
    bfc_ref   : [1, CP]             FC bias
    logits_ref: [BP, CP]            output logits (padded)
    xproj_ref : [T*BP, 4H]          VMEM scratch: hoisted layer-0 x-projection
    """
    G = 4 * H

    # Hoisted layer-0 input projection (+ bias) for every timestep: one big MXU
    # matmul off the serial recurrence critical path, stored 2-D (no reshape).
    xproj_ref[...] = (
        jnp.dot(x_ref[...], wih0_ref[...], preferred_element_type=jnp.float32)
        + b0_ref[...]
    )

    # Hoist bias broadcasts out of the unrolled loop (JAX does not CSE them).
    bl_bc = [jnp.broadcast_to(bl_ref[l], (BP, G)) for l in range(L - 1)]

    def sigmoid(v):
        # sigmoid(x) == 0.5*(tanh(x/2)+1): single EUP op per vreg (tanh),
        # mul/add ride the VPU slot.
        return 0.5 * jnp.tanh(0.5 * v) + 0.5

    def cell(gates, c_prev):
        # Unpadded gate layout (PyTorch order): [ i | f | g | o ], H lanes each.
        if_sig = sigmoid(gates[:, 0:2 * H])          # i,f: one aligned vreg pass
        g_tanh = jnp.tanh(gates[:, 2 * H:3 * H])     # g: half vreg
        o_sig = sigmoid(gates[:, 3 * H:4 * H])       # o: half vreg
        i_g = if_sig[:, 0:H]
        f_g = if_sig[:, H:2 * H]                     # offset slice -> XLU roll (free slot)
        c_new = f_g * c_prev + i_g * g_tanh
        h_new = o_sig * jnp.tanh(c_new)
        return h_new, c_new

    def step(t, carry):
        hs, cs = carry
        new_hs, new_cs = [], []
        # Layer 0: only the recurrent matmul sits on the serial path.
        row = pl.multiple_of(t * BP, BP)
        gates0 = xproj_ref[pl.ds(row, BP), :] + jnp.dot(
            hs[0], whh0_ref[...], preferred_element_type=jnp.float32)
        h0, c0 = cell(gates0, cs[0])
        new_hs.append(h0)
        new_cs.append(c0)
        # Layers 1..L-1 (wavefront): consume this timestep's h from the layer
        # below immediately; fused [h_below | h_own] @ [W_ih^T ; W_hh^T].
        for l in range(1, L):
            z = jnp.concatenate([new_hs[l - 1], hs[l]], axis=1)      # [BP, 2H]
            gates = jnp.dot(z, wcat_ref[l - 1],
                            preferred_element_type=jnp.float32) + bl_bc[l - 1]
            h_l, c_l = cell(gates, cs[l])
            new_hs.append(h_l)
            new_cs.append(c_l)
        return tuple(new_hs), tuple(new_cs)

    zeros = jnp.zeros((BP, H), jnp.float32)
    init = (tuple(zeros for _ in range(L)), tuple(zeros for _ in range(L)))
    # Fully unrolled (T small & static) so the scheduler can overlap MXU / EUP /
    # XLU work across adjacent (layer, t) stages of the wavefront.
    hs_final, _ = lax.fori_loop(0, T, step, init, unroll=True)

    # FC head on h_T of the last layer only (the per-step hidden sequence of
    # the last layer is never stored).
    logits_ref[...] = (
        jnp.dot(hs_final[L - 1], wfc_ref[...],
                preferred_element_type=jnp.float32)
        + bfc_ref[...]
    )


# ---------------------------------------------------------------------------
# Parameter preparation (done once; weights are static)
# ---------------------------------------------------------------------------
def prepare_lstm_classifier_params(lstm_params, fc_w, fc_b):
    """Pad / transpose / stack PyTorch-layout LSTM + FC params for the kernel.

    lstm_params: list of (w_ih [4H, Din], w_hh [4H, H], b_ih [4H], b_hh [4H])
    fc_w: [C, H], fc_b: [C]
    """
    H = lstm_params[0][1].shape[1]
    D = lstm_params[0][0].shape[1]
    C = fc_w.shape[0]
    G = 4 * H
    assert G % 128 == 0, "4*hidden_size must be a multiple of 128 (unpadded-gate layout)"
    assert H % 8 == 0
    FP = _round_up(D, 128)
    CP = _round_up(C, 128)

    # Layer 0: keep W_ih and W_hh separate (x-projection is hoisted in-kernel).
    w_ih0, w_hh0, b_ih0, b_hh0 = lstm_params[0]
    wih0 = jnp.pad(jnp.asarray(w_ih0, jnp.float32).T, ((0, FP - D), (0, 0)))  # [FP, G]
    whh0 = jnp.asarray(w_hh0, jnp.float32).T                                   # [H, G]
    b0 = jnp.asarray(b_ih0 + b_hh0, jnp.float32).reshape(1, G)

    # Layers > 0: fuse input + recurrent weights into one [2H, G] matrix.
    wcat_list, bl_list = [], []
    for (w_ih, w_hh, b_ih, b_hh) in lstm_params[1:]:
        wcat = jnp.concatenate([jnp.asarray(w_ih, jnp.float32).T,
                                jnp.asarray(w_hh, jnp.float32).T], axis=0)     # [2H, G]
        wcat_list.append(wcat)
        bl_list.append(jnp.asarray(b_ih + b_hh, jnp.float32).reshape(1, G))
    if not wcat_list:  # single-layer model: dummy (unused) slab
        wcat_list.append(jnp.zeros((2 * H, G), jnp.float32))
        bl_list.append(jnp.zeros((1, G), jnp.float32))
    wcat = jnp.stack(wcat_list)                                                # [max(L-1,1), 2H, G]
    bl = jnp.stack(bl_list)                                                    # [max(L-1,1), 1, G]

    wfc = jnp.pad(jnp.asarray(fc_w, jnp.float32).T, ((0, 0), (0, CP - C)))     # [H, CP]
    bfc = jnp.pad(jnp.asarray(fc_b, jnp.float32), (0, CP - C)).reshape(1, CP)
    return wih0, whh0, b0, wcat, bl, wfc, bfc


# ---------------------------------------------------------------------------
# Forward wrapper
# ---------------------------------------------------------------------------
@functools.partial(jax.jit, static_argnames=("num_layers", "num_classes"))
def lstm_classifier_forward(x, wih0, whh0, b0, wcat, bl, wfc, bfc, *,
                            num_layers, num_classes):
    """Equivalent of LSTMClassifier.forward.

    x: [B, T, input_size] (batch_first). Returns logits [B, num_classes].
    """
    B, T, D = x.shape
    FP = wih0.shape[0]
    H, G = whh0.shape
    CP = wfc.shape[1]
    BP = _round_up(B, 8)                                   # sublane-aligned batch

    # batch_first -> time-major, pad batch to 8 sublanes and features to FP
    # lanes, flatten to 2-D so the in-kernel x-projection needs no reshape.
    x_t = jnp.transpose(x, (1, 0, 2)).astype(jnp.float32)        # [T, B, D]
    x_p = jnp.pad(x_t, ((0, 0), (0, BP - B), (0, FP - D)))       # [T, BP, FP]
    x2d = x_p.reshape(T * BP, FP)                                # [T*BP, FP]

    cost = pl.CostEstimate(
        flops=int(2 * T * BP * FP * G
                  + T * (2 * BP * H * G + (num_layers - 1) * 2 * BP * (2 * H) * G)
                  + 2 * BP * H * CP),
        transcendentals=int(T * num_layers * BP * 5 * H),
        bytes_accessed=int(4 * (x2d.size + wih0.size + whh0.size + b0.size
                                + wcat.size + bl.size + wfc.size + bfc.size
                                + BP * CP)),
    )

    logits_p = pl.pallas_call(
        functools.partial(fused_lstm_classifier_kernel,
                          T=T, BP=BP, L=num_layers, H=H),
        out_shape=jax.ShapeDtypeStruct((BP, CP), jnp.float32),
        in_specs=[_VMEM] * 8,
        out_specs=_VMEM,
        scratch_shapes=[
            pltpu.VMEM((T * BP, G), jnp.float32),   # hoisted layer-0 x-projection
        ],
        cost_estimate=cost,
    )(x2d, wih0, whh0, b0, wcat, bl, wfc, bfc)
    return logits_p[:B, :num_classes]


# ---------------------------------------------------------------------------
# Pure-JAX reference (unpadded) for correctness check
# ---------------------------------------------------------------------------
def lstm_classifier_ref(x, lstm_params, fc_w, fc_b):
    h_seq = jnp.transpose(x, (1, 0, 2)).astype(jnp.float32)
    h_n = None
    for (w_ih, w_hh, b_ih, b_hh) in lstm_params:
        H = w_hh.shape[1]
        B = h_seq.shape[1]

        def step(carry, x_t):
            hh, cc = carry
            gates = x_t @ w_ih.T + hh @ w_hh.T + b_ih + b_hh
            i, f, g, o = jnp.split(gates, 4, axis=-1)
            i = jax.nn.sigmoid(i)
            f = jax.nn.sigmoid(f)
            g = jnp.tanh(g)
            o = jax.nn.sigmoid(o)
            cc = f * cc + i * g
            hh = o * jnp.tanh(cc)
            return (hh, cc), hh

        init = (jnp.zeros((B, H), jnp.float32), jnp.zeros((B, H), jnp.float32))
        (h_n, _), h_seq = lax.scan(step, init, h_seq)
    return h_n @ fc_w.T + fc_b


# ---------------------------------------------------------------------------
# Main
# ---------------------------------------------------------------------------
if __name__ == "__main__":
    # Module hyperparameters (input_size = problemDim = 2, hidden_size = 64;
    # num_layers / num_classes come from argparse in the original -> pick small).
    input_size = 2
    hidden_size = 64
    num_layers = 2
    num_classes = 4

    batch = 2
    seq_len = 8

    key = jax.random.PRNGKey(0)
    keys = iter(jax.random.split(key, 4 * num_layers + 3))

    # Deterministic parameter init (uniform, PyTorch-like scale 1/sqrt(H)).
    scale = 1.0 / jnp.sqrt(jnp.float32(hidden_size))
    lstm_params = []
    for layer in range(num_layers):
        d_in = input_size if layer == 0 else hidden_size
        w_ih = jax.random.uniform(next(keys), (4 * hidden_size, d_in),
                                  jnp.float32, -scale, scale)
        w_hh = jax.random.uniform(next(keys), (4 * hidden_size, hidden_size),
                                  jnp.float32, -scale, scale)
        b_ih = jax.random.uniform(next(keys), (4 * hidden_size,),
                                  jnp.float32, -scale, scale)
        b_hh = jax.random.uniform(next(keys), (4 * hidden_size,),
                                  jnp.float32, -scale, scale)
        lstm_params.append((w_ih, w_hh, b_ih, b_hh))

    fc_w = jax.random.uniform(next(keys), (num_classes, hidden_size),
                              jnp.float32, -scale, scale)
    fc_b = jax.random.uniform(next(keys), (num_classes,),
                              jnp.float32, -scale, scale)

    x = jax.random.normal(next(keys), (batch, seq_len, input_size), jnp.float32)

    # Pad / transpose / stack weights once (weights are static across calls).
    packed = prepare_lstm_classifier_params(lstm_params, fc_w, fc_b)

    logits = lstm_classifier_forward(x, *packed, num_layers=num_layers,
                                     num_classes=num_classes)
    logits = jax.block_until_ready(logits)

    ref = jax.block_until_ready(lstm_classifier_ref(x, lstm_params, fc_w, fc_b))
    assert logits.shape == (batch, num_classes)
    assert jnp.allclose(logits, ref, atol=1e-4, rtol=1e-4), (logits, ref)

    print("KERNEL_OK")
</pallas_src>

<mosaic_0001>
module attributes {stable_mosaic.version = 11 : i64} {
  func.func @fused_lstm_classifier_kernel(%arg0: memref<64x128xf32, #tpu.memory_space<vmem>>, %arg1: memref<128x256xf32, #tpu.memory_space<vmem>>, %arg2: memref<64x256xf32, #tpu.memory_space<vmem>>, %arg3: memref<1x256xf32, #tpu.memory_space<vmem>>, %arg4: memref<1x128x256xf32, #tpu.memory_space<vmem>>, %arg5: memref<1x1x256xf32, #tpu.memory_space<vmem>>, %arg6: memref<64x128xf32, #tpu.memory_space<vmem>>, %arg7: memref<1x128xf32, #tpu.memory_space<vmem>>, %arg8: memref<8x128xf32, #tpu.memory_space<vmem>>, %arg9: memref<64x256xf32, #tpu.memory_space<vmem>>) attributes {dimension_semantics = [], scalar_prefetch = 0 : i64, scratch_operands = 1 : i64, tpu.core_type = #tpu.core_type<tc>} {
    %c0 = arith.constant 0 : index
    %c0_0 = arith.constant 0 : index
    %0 = vector.load %arg0[%c0, %c0_0] : memref<64x128xf32, #tpu.memory_space<vmem>>, vector<64x128xf32>
    %c0_1 = arith.constant 0 : index
    %c0_2 = arith.constant 0 : index
    %1 = vector.load %arg1[%c0_1, %c0_2] : memref<128x256xf32, #tpu.memory_space<vmem>>, vector<128x256xf32>
    %cst = arith.constant dense<0.000000e+00> : vector<64x256xf32>
    %2 = tpu.matmul %0, %1, %cst {dimension_numbers = #tpu.dot_dimension_numbers<[1], [0], [0], [1], [0, 0, 1, 1], [], []>} : vector<64x128xf32>, vector<128x256xf32>, vector<64x256xf32> -> vector<64x256xf32>
    %c0_3 = arith.constant 0 : index
    %c0_4 = arith.constant 0 : index
    %3 = vector.load %arg3[%c0_3, %c0_4] : memref<1x256xf32, #tpu.memory_space<vmem>>, vector<1x256xf32>
    %4 = vector.broadcast %3 : vector<1x256xf32> to vector<64x256xf32>
    %5 = arith.addf %2, %4 : vector<64x256xf32>
    %c0_5 = arith.constant 0 : index
    %c0_6 = arith.constant 0 : index
    %6 = vector.load %arg9[%c0_5, %c0_6] : memref<64x256xf32, #tpu.memory_space<vmem>>, vector<64x256xf32>
    tpu.vector_store %arg9[%c0_5, %c0_6], %5 {strides = array<i32>} : memref<64x256xf32, #tpu.memory_space<vmem>>, vector<64x256xf32>,
    %c0_7 = arith.constant 0 : index
    %c0_8 = arith.constant 0 : index
    %c0_9 = arith.constant 0 : index
    %7 = vector.load %arg5[%c0_7, %c0_8, %c0_9] : memref<1x1x256xf32, #tpu.memory_space<vmem>>, vector<1x1x256xf32>
    %8 = vector.shape_cast %7 : vector<1x1x256xf32> to vector<1x256xf32>
    %9 = vector.shape_cast %8 : vector<1x256xf32> to vector<1x256xf32>
    %10 = vector.broadcast %9 : vector<1x256xf32> to vector<8x256xf32>
    %cst_10 = arith.constant 0.000000e+00 : f32
    %11 = vector.broadcast %cst_10 : f32 to vector<8x64xf32>
    %c0_i32 = arith.constant 0 : i32
    %c8_i32 = arith.constant 8 : i32
    %12 = arith.muli %c0_i32, %c8_i32 : i32
    %13 = tpu.assume_multiple %12, 8 : i32
    %14 = arith.index_cast %13 : i32 to index
    %c0_11 = arith.constant 0 : index
    %15 = vector.load %arg9[%14, %c0_11] : memref<64x256xf32, #tpu.memory_space<vmem>>, vector<8x256xf32>
    %c0_12 = arith.constant 0 : index
    %c0_13 = arith.constant 0 : index
    %16 = vector.load %arg2[%c0_12, %c0_13] : memref<64x256xf32, #tpu.memory_space<vmem>>, vector<64x256xf32>
    %cst_14 = arith.constant dense<0.000000e+00> : vector<8x256xf32>
    %17 = tpu.matmul %11, %16, %cst_14 {dimension_numbers = #tpu.dot_dimension_numbers<[1], [0], [0], [1], [0, 0, 1, 1], [], []>} : vector<8x64xf32>, vector<64x256xf32>, vector<8x256xf32> -> vector<8x256xf32>
    %18 = arith.addf %15, %17 : vector<8x256xf32>
    %19 = vector.extract_strided_slice %18 {offsets = [0, 0], sizes = [8, 128], strides = [1, 1]} : vector<8x256xf32> to vector<8x128xf32>
    %cst_15 = arith.constant 5.000000e-01 : f32
    %20 = vector.broadcast %cst_15 : f32 to vector<8x128xf32>
    %21 = arith.mulf %20, %19 : vector<8x128xf32>
    %22 = math.tanh %21 : vector<8x128xf32>
    %cst_16 = arith.constant 5.000000e-01 : f32
    %23 = vector.broadcast %cst_16 : f32 to vector<8x128xf32>
    %24 = arith.mulf %23, %22 : vector<8x128xf32>
    %cst_17 = arith.constant 5.000000e-01 : f32
    %25 = vector.broadcast %cst_17 : f32 to vector<8x128xf32>
    %26 = arith.addf %24, %25 : vector<8x128xf32>
    %27 = vector.extract_strided_slice %18 {offsets = [0, 128], sizes = [8, 64], strides = [1, 1]} : vector<8x256xf32> to vector<8x64xf32>
    %28 = math.tanh %27 : vector<8x64xf32>
    %29 = vector.extract_strided_slice %18 {offsets = [0, 192], sizes = [8, 64], strides = [1, 1]} : vector<8x256xf32> to vector<8x64xf32>
    %cst_18 = arith.constant 5.000000e-01 : f32
    %30 = vector.broadcast %cst_18 : f32 to vector<8x64xf32>
    %31 = arith.mulf %30, %29 : vector<8x64xf32>
    %32 = math.tanh %31 : vector<8x64xf32>
    %cst_19 = arith.constant 5.000000e-01 : f32
    %33 = vector.broadcast %cst_19 : f32 to vector<8x64xf32>
    %34 = arith.mulf %33, %32 : vector<8x64xf32>
    %cst_20 = arith.constant 5.000000e-01 : f32
    %35 = vector.broadcast %cst_20 : f32 to vector<8x64xf32>
    %36 = arith.addf %34, %35 : vector<8x64xf32>
    %37 = vector.extract_strided_slice %26 {offsets = [0, 0], sizes = [8, 64], strides = [1, 1]} : vector<8x128xf32> to vector<8x64xf32>
    %38 = vector.extract_strided_slice %26 {offsets = [0, 64], sizes = [8, 64], strides = [1, 1]} : vector<8x128xf32> to vector<8x64xf32>
    %39 = arith.mulf %38, %11 : vector<8x64xf32>
    %40 = arith.mulf %37, %28 : vector<8x64xf32>
    %41 = arith.addf %39, %40 : vector<8x64xf32>
    %42 = math.tanh %41 : vector<8x64xf32>
    %43 = arith.mulf %36, %42 : vector<8x64xf32>
    %44 = tpu.concatenate %43, %11 in 1 : vector<8x64xf32>, vector<8x64xf32> -> vector<8x128xf32>
    %c0_21 = arith.constant 0 : index
    %c0_22 = arith.constant 0 : index
    %c0_23 = arith.constant 0 : index
    %45 = vector.load %arg4[%c0_21, %c0_22, %c0_23] : memref<1x128x256xf32, #tpu.memory_space<vmem>>, vector<1x128x256xf32>
    %46 = vector.shape_cast %45 : vector<1x128x256xf32> to vector<128x256xf32>
    %cst_24 = arith.constant dense<0.000000e+00> : vector<8x256xf32>
    %47 = tpu.matmul %44, %46, %cst_24 {dimension_numbers = #tpu.dot_dimension_numbers<[1], [0], [0], [1], [0, 0, 1, 1], [], []>} : vector<8x128xf32>, vector<128x256xf32>, vector<8x256xf32> -> vector<8x256xf32>
    %48 = arith.addf %47, %10 : vector<8x256xf32>
    %49 = vector.extract_strided_slice %48 {offsets = [0, 0], sizes = [8, 128], strides = [1, 1]} : vector<8x256xf32> to vector<8x128xf32>
    %cst_25 = arith.constant 5.000000e-01 : f32
    %50 = vector.broadcast %cst_25 : f32 to vector<8x128xf32>
    %51 = arith.mulf %50, %49 : vector<8x128xf32>
    %52 = math.tanh %51 : vector<8x128xf32>
    %cst_26 = arith.constant 5.000000e-01 : f32
    %53 = vector.broadcast %cst_26 : f32 to vector<8x128xf32>
    %54 = arith.mulf %53, %52 : vector<8x128xf32>
    %cst_27 = arith.constant 5.000000e-01 : f32
    %55 = vector.broadcast %cst_27 : f32 to vector<8x128xf32>
    %56 = arith.addf %54, %55 : vector<8x128xf32>
    %57 = vector.extract_strided_slice %48 {offsets = [0, 128], sizes = [8, 64], strides = [1, 1]} : vector<8x256xf32> to vector<8x64xf32>
    %58 = math.tanh %57 : vector<8x64xf32>
    %59 = vector.extract_strided_slice %48 {offsets = [0, 192], sizes = [8, 64], strides = [1, 1]} : vector<8x256xf32> to vector<8x64xf32>
    %cst_28 = arith.constant 5.000000e-01 : f32
    %60 = vector.broadcast %cst_28 : f32 to vector<8x64xf32>
    %61 = arith.mulf %60, %59 : vector<8x64xf32>
    %62 = math.tanh %61 : vector<8x64xf32>
    %cst_29 = arith.constant 5.000000e-01 : f32
    %63 = vector.broadcast %cst_29 : f32 to vector<8x64xf32>
    %64 = arith.mulf %63, %62 : vector<8x64xf32>
    %cst_30 = arith.constant 5.000000e-01 : f32
    %65 = vector.broadcast %cst_30 : f32 to vector<8x64xf32>
    %66 = arith.addf %64, %65 : vector<8x64xf32>
    %67 = vector.extract_strided_slice %56 {offsets = [0, 0], sizes = [8, 64], strides = [1, 1]} : vector<8x128xf32> to vector<8x64xf32>
    %68 = vector.extract_strided_slice %56 {offsets = [0, 64], sizes = [8, 64], strides = [1, 1]} : vector<8x128xf32> to vector<8x64xf32>
    %69 = arith.mulf %68, %11 : vector<8x64xf32>
    %70 = arith.mulf %67, %58 : vector<8x64xf32>
    %71 = arith.addf %69, %70 : vector<8x64xf32>
    %72 = math.tanh %71 : vector<8x64xf32>
    %73 = arith.mulf %66, %72 : vector<8x64xf32>
    %c1_i32 = arith.constant 1 : i32
    %c8_i32_31 = arith.constant 8 : i32
    %74 = arith.muli %c1_i32, %c8_i32_31 : i32
    %75 = tpu.assume_multiple %74, 8 : i32
    %76 = arith.index_cast %75 : i32 to index
    %c0_32 = arith.constant 0 : index
    %77 = vector.load %arg9[%76, %c0_32] : memref<64x256xf32, #tpu.memory_space<vmem>>, vector<8x256xf32>
    %c0_33 = arith.constant 0 : index
    %c0_34 = arith.constant 0 : index
    %78 = vector.load %arg2[%c0_33, %c0_34] : memref<64x256xf32, #tpu.memory_space<vmem>>, vector<64x256xf32>
    %cst_35 = arith.constant dense<0.000000e+00> : vector<8x256xf32>
    %79 = tpu.matmul %43, %78, %cst_35 {dimension_numbers = #tpu.dot_dimension_numbers<[1], [0], [0], [1], [0, 0, 1, 1], [], []>} : vector<8x64xf32>, vector<64x256xf32>, vector<8x256xf32> -> vector<8x256xf32>
    %80 = arith.addf %77, %79 : vector<8x256xf32>
    %81 = vector.extract_strided_slice %80 {offsets = [0, 0], sizes = [8, 128], strides = [1, 1]} : vector<8x256xf32> to vector<8x128xf32>
    %cst_36 = arith.constant 5.000000e-01 : f32
    %82 = vector.broadcast %cst_36 : f32 to vector<8x128xf32>
    %83 = arith.mulf %82, %81 : vector<8x128xf32>
    %84 = math.tanh %83 : vector<8x128xf32>
    %cst_37 = arith.constant 5.000000e-01 : f32
    %85 = vector.broadcast %cst_37 : f32 to vector<8x128xf32>
    %86 = arith.mulf %85, %84 : vector<8x128xf32>
    %cst_38 = arith.constant 5.000000e-01 : f32
    %87 = vector.broadcast %cst_38 : f32 to vector<8x128xf32>
    %88 = arith.addf %86, %87 : vector<8x128xf32>
    %89 = vector.extract_strided_slice %80 {offsets = [0, 128], sizes = [8, 64], strides = [1, 1]} : vector<8x256xf32> to vector<8x64xf32>
    %90 = math.tanh %89 : vector<8x64xf32>
    %91 = vector.extract_strided_slice %80 {offsets = [0, 192], sizes = [8, 64], strides = [1, 1]} : vector<8x256xf32> to vector<8x64xf32>
    %cst_39 = arith.constant 5.000000e-01 : f32
    %92 = vector.broadcast %cst_39 : f32 to vector<8x64xf32>
    %93 = arith.mulf %92, %91 : vector<8x64xf32>
    %94 = math.tanh %93 : vector<8x64xf32>
    %cst_40 = arith.constant 5.000000e-01 : f32
    %95 = vector.broadcast %cst_40 : f32 to vector<8x64xf32>
    %96 = arith.mulf %95, %94 : vector<8x64xf32>
    %cst_41 = arith.constant 5.000000e-01 : f32
    %97 = vector.broadcast %cst_41 : f32 to vector<8x64xf32>
    %98 = arith.addf %96, %97 : vector<8x64xf32>
    %99 = vector.extract_strided_slice %88 {offsets = [0, 0], sizes = [8, 64], strides = [1, 1]} : vector<8x128xf32> to vector<8x64xf32>
    %100 = vector.extract_strided_slice %88 {offsets = [0, 64], sizes = [8, 64], strides = [1, 1]} : vector<8x128xf32> to vector<8x64xf32>
    %101 = arith.mulf %100, %41 : vector<8x64xf32>
    %102 = arith.mulf %99, %90 : vector<8x64xf32>
    %103 = arith.addf %101, %102 : vector<8x64xf32>
    %104 = math.tanh %103 : vector<8x64xf32>
    %105 = arith.mulf %98, %104 : vector<8x64xf32>
    %106 = tpu.concatenate %105, %73 in 1 : vector<8x64xf32>, vector<8x64xf32> -> vector<8x128xf32>
    %c0_42 = arith.constant 0 : index
    %c0_43 = arith.constant 0 : index
    %c0_44 = arith.constant 0 : index
    %107 = vector.load %arg4[%c0_42, %c0_43, %c0_44] : memref<1x128x256xf32, #tpu.memory_space<vmem>>, vector<1x128x256xf32>
    %108 = vector.shape_cast %107 : vector<1x128x256xf32> to vector<128x256xf32>
    %cst_45 = arith.constant dense<0.000000e+00> : vector<8x256xf32>
    %109 = tpu.matmul %106, %108, %cst_45 {dimension_numbers = #tpu.dot_dimension_numbers<[1], [0], [0], [1], [0, 0, 1, 1], [], []>} : vector<8x128xf32>, vector<128x256xf32>, vector<8x256xf32> -> vector<8x256xf32>
    %110 = arith.addf %109, %10 : vector<8x256xf32>
    %111 = vector.extract_strided_slice %110 {offsets = [0, 0], sizes = [8, 128], strides = [1, 1]} : vector<8x256xf32> to vector<8x128xf32>
    %cst_46 = arith.constant 5.000000e-01 : f32
    %112 = vector.broadcast %cst_46 : f32 to vector<8x128xf32>
    %113 = arith.mulf %112, %111 : vector<8x128xf32>
    %114 = math.tanh %113 : vector<8x128xf32>
    %cst_47 = arith.constant 5.000000e-01 : f32
    %115 = vector.broadcast %cst_47 : f32 to vector<8x128xf32>
    %116 = arith.mulf %115, %114 : vector<8x128xf32>
    %cst_48 = arith.constant 5.000000e-01 : f32
    %117 = vector.broadcast %cst_48 : f32 to vector<8x128xf32>
    %118 = arith.addf %116, %117 : vector<8x128xf32>
    %119 = vector.extract_strided_slice %110 {offsets = [0, 128], sizes = [8, 64], strides = [1, 1]} : vector<8x256xf32> to vector<8x64xf32>
    %120 = math.tanh %119 : vector<8x64xf32>
    %121 = vector.extract_strided_slice %110 {offsets = [0, 192], sizes = [8, 64], strides = [1, 1]} : vector<8x256xf32> to vector<8x64xf32>
    %cst_49 = arith.constant 5.000000e-01 : f32
    %122 = vector.broadcast %cst_49 : f32 to vector<8x64xf32>
    %123 = arith.mulf %122, %121 : vector<8x64xf32>
    %124 = math.tanh %123 : vector<8x64xf32>
    %cst_50 = arith.constant 5.000000e-01 : f32
    %125 = vector.broadcast %cst_50 : f32 to vector<8x64xf32>
    %126 = arith.mulf %125, %124 : vector<8x64xf32>
    %cst_51 = arith.constant 5.000000e-01 : f32
    %127 = vector.broadcast %cst_51 : f32 to vector<8x64xf32>
    %128 = arith.addf %126, %127 : vector<8x64xf32>
    %129 = vector.extract_strided_slice %118 {offsets = [0, 0], sizes = [8, 64], strides = [1, 1]} : vector<8x128xf32> to vector<8x64xf32>
    %130 = vector.extract_strided_slice %118 {offsets = [0, 64], sizes = [8, 64], strides = [1, 1]} : vector<8x128xf32> to vector<8x64xf32>
    %131 = arith.mulf %130, %71 : vector<8x64xf32>
    %132 = arith.mulf %129, %120 : vector<8x64xf32>
    %133 = arith.addf %131, %132 : vector<8x64xf32>
    %134 = math.tanh %133 : vector<8x64xf32>
    %135 = arith.mulf %128, %134 : vector<8x64xf32>
    %c2_i32 = arith.constant 2 : i32
    %c8_i32_52 = arith.constant 8 : i32
    %136 = arith.muli %c2_i32, %c8_i32_52 : i32
    %137 = tpu.assume_multiple %136, 8 : i32
    %138 = arith.index_cast %137 : i32 to index
    %c0_53 = arith.constant 0 : index
    %139 = vector.load %arg9[%138, %c0_53] : memref<64x256xf32, #tpu.memory_space<vmem>>, vector<8x256xf32>
    %c0_54 = arith.constant 0 : index
    %c0_55 = arith.constant 0 : index
    %140 = vector.load %arg2[%c0_54, %c0_55] : memref<64x256xf32, #tpu.memory_space<vmem>>, vector<64x256xf32>
    %cst_56 = arith.constant dense<0.000000e+00> : vector<8x256xf32>
    %141 = tpu.matmul %105, %140, %cst_56 {dimension_numbers = #tpu.dot_dimension_numbers<[1], [0], [0], [1], [0, 0, 1, 1], [], []>} : vector<8x64xf32>, vector<64x256xf32>, vector<8x256xf32> -> vector<8x256xf32>
    %142 = arith.addf %139, %141 : vector<8x256xf32>
    %143 = vector.extract_strided_slice %142 {offsets = [0, 0], sizes = [8, 128], strides = [1, 1]} : vector<8x256xf32> to vector<8x128xf32>
    %cst_57 = arith.constant 5.000000e-01 : f32
    %144 = vector.broadcast %cst_57 : f32 to vector<8x128xf32>
    %145 = arith.mulf %144, %143 : vector<8x128xf32>
    %146 = math.tanh %145 : vector<8x128xf32>
    %cst_58 = arith.constant 5.000000e-01 : f32
    %147 = vector.broadcast %cst_58 : f32 to vector<8x128xf32>
    %148 = arith.mulf %147, %146 : vector<8x128xf32>
    %cst_59 = arith.constant 5.000000e-01 : f32
    %149 = vector.broadcast %cst_59 : f32 to vector<8x128xf32>
    %150 = arith.addf %148, %149 : vector<8x128xf32>
    %151 = vector.extract_strided_slice %142 {offsets = [0, 128], sizes = [8, 64], strides = [1, 1]} : vector<8x256xf32> to vector<8x64xf32>
    %152 = math.tanh %151 : vector<8x64xf32>
    %153 = vector.extract_strided_slice %142 {offsets = [0, 192], sizes = [8, 64], strides = [1, 1]} : vector<8x256xf32> to vector<8x64xf32>
    %cst_60 = arith.constant 5.000000e-01 : f32
    %154 = vector.broadcast %cst_60 : f32 to vector<8x64xf32>
    %155 = arith.mulf %154, %153 : vector<8x64xf32>
    %156 = math.tanh %155 : vector<8x64xf32>
    %cst_61 = arith.constant 5.000000e-01 : f32
    %157 = vector.broadcast %cst_61 : f32 to vector<8x64xf32>
    %158 = arith.mulf %157, %156 : vector<8x64xf32>
    %cst_62 = arith.constant 5.000000e-01 : f32
    %159 = vector.broadcast %cst_62 : f32 to vector<8x64xf32>
    %160 = arith.addf %158, %159 : vector<8x64xf32>
    %161 = vector.extract_strided_slice %150 {offsets = [0, 0], sizes = [8, 64], strides = [1, 1]} : vector<8x128xf32> to vector<8x64xf32>
    %162 = vector.extract_strided_slice %150 {offsets = [0, 64], sizes = [8, 64], strides = [1, 1]} : vector<8x128xf32> to vector<8x64xf32>
    %163 = arith.mulf %162, %103 : vector<8x64xf32>
    %164 = arith.mulf %161, %152 : vector<8x64xf32>
    %165 = arith.addf %163, %164 : vector<8x64xf32>
    %166 = math.tanh %165 : vector<8x64xf32>
    %167 = arith.mulf %160, %166 : vector<8x64xf32>
    %168 = tpu.concatenate %167, %135 in 1 : vector<8x64xf32>, vector<8x64xf32> -> vector<8x128xf32>
    %c0_63 = arith.constant 0 : index
    %c0_64 = arith.constant 0 : index
    %c0_65 = arith.constant 0 : index
    %169 = vector.load %arg4[%c0_63, %c0_64, %c0_65] : memref<1x128x256xf32, #tpu.memory_space<vmem>>, vector<1x128x256xf32>
    %170 = vector.shape_cast %169 : vector<1x128x256xf32> to vector<128x256xf32>
    %cst_66 = arith.constant dense<0.000000e+00> : vector<8x256xf32>
    %171 = tpu.matmul %168, %170, %cst_66 {dimension_numbers = #tpu.dot_dimension_numbers<[1], [0], [0], [1], [0, 0, 1, 1], [], []>} : vector<8x128xf32>, vector<128x256xf32>, vector<8x256xf32> -> vector<8x256xf32>
    %172 = arith.addf %171, %10 : vector<8x256xf32>
    %173 = vector.extract_strided_slice %172 {offsets = [0, 0], sizes = [8, 128], strides = [1, 1]} : vector<8x256xf32> to vector<8x128xf32>
    %cst_67 = arith.constant 5.000000e-01 : f32
    %174 = vector.broadcast %cst_67 : f32 to vector<8x128xf32>
    %175 = arith.mulf %174, %173 : vector<8x128xf32>
    %176 = math.tanh %175 : vector<8x128xf32>
    %cst_68 = arith.constant 5.000000e-01 : f32
    %177 = vector.broadcast %cst_68 : f32 to vector<8x128xf32>
    %178 = arith.mulf %177, %176 : vector<8x128xf32>
    %cst_69 = arith.constant 5.000000e-01 : f32
    %179 = vector.broadcast %cst_69 : f32 to vector<8x128xf32>
    %180 = arith.addf %178, %179 : vector<8x128xf32>
    %181 = vector.extract_strided_slice %172 {offsets = [0, 128], sizes = [8, 64], strides = [1, 1]} : vector<8x256xf32> to vector<8x64xf32>
    %182 = math.tanh %181 : vector<8x64xf32>
    %183 = vector.extract_strided_slice %172 {offsets = [0, 192], sizes = [8, 64], strides = [1, 1]} : vector<8x256xf32> to vector<8x64xf32>
    %cst_70 = arith.constant 5.000000e-01 : f32
    %184 = vector.broadcast %cst_70 : f32 to vector<8x64xf32>
    %185 = arith.mulf %184, %183 : vector<8x64xf32>
    %186 = math.tanh %185 : vector<8x64xf32>
    %cst_71 = arith.constant 5.000000e-01 : f32
    %187 = vector.broadcast %cst_71 : f32 to vector<8x64xf32>
    %188 = arith.mulf %187, %186 : vector<8x64xf32>
    %cst_72 = arith.constant 5.000000e-01 : f32
    %189 = vector.broadcast %cst_72 : f32 to vector<8x64xf32>
    %190 = arith.addf %188, %189 : vector<8x64xf32>
    %191 = vector.extract_strided_slice %180 {offsets = [0, 0], sizes = [8, 64], strides = [1, 1]} : vector<8x128xf32> to vector<8x64xf32>
    %192 = vector.extract_strided_slice %180 {offsets = [0, 64], sizes = [8, 64], strides = [1, 1]} : vector<8x128xf32> to vector<8x64xf32>
    %193 = arith.mulf %192, %133 : vector<8x64xf32>
    %194 = arith.mulf %191, %182 : vector<8x64xf32>
    %195 = arith.addf %193, %194 : vector<8x64xf32>
    %196 = math.tanh %195 : vector<8x64xf32>
    %197 = arith.mulf %190, %196 : vector<8x64xf32>
    %c3_i32 = arith.constant 3 : i32
    %c8_i32_73 = arith.constant 8 : i32
    %198 = arith.muli %c3_i32, %c8_i32_73 : i32
    %199 = tpu.assume_multiple %198, 8 : i32
    %200 = arith.index_cast %199 : i32 to index
    %c0_74 = arith.constant 0 : index
    %201 = vector.load %arg9[%200, %c0_74] : memref<64x256xf32, #tpu.memory_space<vmem>>, vector<8x256xf32>
    %c0_75 = arith.constant 0 : index
    %c0_76 = arith.constant 0 : index
    %202 = vector.load %arg2[%c0_75, %c0_76] : memref<64x256xf32, #tpu.memory_space<vmem>>, vector<64x256xf32>
    %cst_77 = arith.constant dense<0.000000e+00> : vector<8x256xf32>
    %203 = tpu.matmul %167, %202, %cst_77 {dimension_numbers = #tpu.dot_dimension_numbers<[1], [0], [0], [1], [0, 0, 1, 1], [], []>} : vector<8x64xf32>, vector<64x256xf32>, vector<8x256xf32> -> vector<8x256xf32>
    %204 = arith.addf %201, %203 : vector<8x256xf32>
    %205 = vector.extract_strided_slice %204 {offsets = [0, 0], sizes = [8, 128], strides = [1, 1]} : vector<8x256xf32> to vector<8x128xf32>
    %cst_78 = arith.constant 5.000000e-01 : f32
    %206 = vector.broadcast %cst_78 : f32 to vector<8x128xf32>
    %207 = arith.mulf %206, %205 : vector<8x128xf32>
    %208 = math.tanh %207 : vector<8x128xf32>
    %cst_79 = arith.constant 5.000000e-01 : f32
    %209 = vector.broadcast %cst_79 : f32 to vector<8x128xf32>
    %210 = arith.mulf %209, %208 : vector<8x128xf32>
    %cst_80 = arith.constant 5.000000e-01 : f32
    %211 = vector.broadcast %cst_80 : f32 to vector<8x128xf32>
    %212 = arith.addf %210, %211 : vector<8x128xf32>
    %213 = vector.extract_strided_slice %204 {offsets = [0, 128], sizes = [8, 64], strides = [1, 1]} : vector<8x256xf32> to vector<8x64xf32>
    %214 = math.tanh %213 : vector<8x64xf32>
    %215 = vector.extract_strided_slice %204 {offsets = [0, 192], sizes = [8, 64], strides = [1, 1]} : vector<8x256xf32> to vector<8x64xf32>
    %cst_81 = arith.constant 5.000000e-01 : f32
    %216 = vector.broadcast %cst_81 : f32 to vector<8x64xf32>
    %217 = arith.mulf %216, %215 : vector<8x64xf32>
    %218 = math.tanh %217 : vector<8x64xf32>
    %cst_82 = arith.constant 5.000000e-01 : f32
    %219 = vector.broadcast %cst_82 : f32 to vector<8x64xf32>
    %220 = arith.mulf %219, %218 : vector<8x64xf32>
    %cst_83 = arith.constant 5.000000e-01 : f32
    %221 = vector.broadcast %cst_83 : f32 to vector<8x64xf32>
    %222 = arith.addf %220, %221 : vector<8x64xf32>
    %223 = vector.extract_strided_slice %212 {offsets = [0, 0], sizes = [8, 64], strides = [1, 1]} : vector<8x128xf32> to vector<8x64xf32>
    %224 = vector.extract_strided_slice %212 {offsets = [0, 64], sizes = [8, 64], strides = [1, 1]} : vector<8x128xf32> to vector<8x64xf32>
    %225 = arith.mulf %224, %165 : vector<8x64xf32>
    %226 = arith.mulf %223, %214 : vector<8x64xf32>
    %227 = arith.addf %225, %226 : vector<8x64xf32>
    %228 = math.tanh %227 : vector<8x64xf32>
    %229 = arith.mulf %222, %228 : vector<8x64xf32>
    %230 = tpu.concatenate %229, %197 in 1 : vector<8x64xf32>, vector<8x64xf32> -> vector<8x128xf32>
    %c0_84 = arith.constant 0 : index
    %c0_85 = arith.constant 0 : index
    %c0_86 = arith.constant 0 : index
    %231 = vector.load %arg4[%c0_84, %c0_85, %c0_86] : memref<1x128x256xf32, #tpu.memory_space<vmem>>, vector<1x128x256xf32>
    %232 = vector.shape_cast %231 : vector<1x128x256xf32> to vector<128x256xf32>
    %cst_87 = arith.constant dense<0.000000e+00> : vector<8x256xf32>
    %233 = tpu.matmul %230, %232, %cst_87 {dimension_numbers = #tpu.dot_dimension_numbers<[1], [0], [0], [1], [0, 0, 1, 1], [], []>} : vector<8x128xf32>, vector<128x256xf32>, vector<8x256xf32> -> vector<8x256xf32>
    %234 = arith.addf %233, %10 : vector<8x256xf32>
    %235 = vector.extract_strided_slice %234 {offsets = [0, 0], sizes = [8, 128], strides = [1, 1]} : vector<8x256xf32> to vector<8x128xf32>
    %cst_88 = arith.constant 5.000000e-01 : f32
    %236 = vector.broadcast %cst_88 : f32 to vector<8x128xf32>
    %237 = arith.mulf %236, %235 : vector<8x128xf32>
    %238 = math.tanh %237 : vector<8x128xf32>
    %cst_89 = arith.constant 5.000000e-01 : f32
    %239 = vector.broadcast %cst_89 : f32 to vector<8x128xf32>
    %240 = arith.mulf %239, %238 : vector<8x128xf32>
    %cst_90 = arith.constant 5.000000e-01 : f32
    %241 = vector.broadcast %cst_90 : f32 to vector<8x128xf32>
    %242 = arith.addf %240, %241 : vector<8x128xf32>
    %243 = vector.extract_strided_slice %234 {offsets = [0, 128], sizes = [8, 64], strides = [1, 1]} : vector<8x256xf32> to vector<8x64xf32>
    %244 = math.tanh %243 : vector<8x64xf32>
    %245 = vector.extract_strided_slice %234 {offsets = [0, 192], sizes = [8, 64], strides = [1, 1]} : vector<8x256xf32> to vector<8x64xf32>
    %cst_91 = arith.constant 5.000000e-01 : f32
    %246 = vector.broadcast %cst_91 : f32 to vector<8x64xf32>
    %247 = arith.mulf %246, %245 : vector<8x64xf32>
    %248 = math.tanh %247 : vector<8x64xf32>
    %cst_92 = arith.constant 5.000000e-01 : f32
    %249 = vector.broadcast %cst_92 : f32 to vector<8x64xf32>
    %250 = arith.mulf %249, %248 : vector<8x64xf32>
    %cst_93 = arith.constant 5.000000e-01 : f32
    %251 = vector.broadcast %cst_93 : f32 to vector<8x64xf32>
    %252 = arith.addf %250, %251 : vector<8x64xf32>
    %253 = vector.extract_strided_slice %242 {offsets = [0, 0], sizes = [8, 64], strides = [1, 1]} : vector<8x128xf32> to vector<8x64xf32>
    %254 = vector.extract_strided_slice %242 {offsets = [0, 64], sizes = [8, 64], strides = [1, 1]} : vector<8x128xf32> to vector<8x64xf32>
    %255 = arith.mulf %254, %195 : vector<8x64xf32>
    %256 = arith.mulf %253, %244 : vector<8x64xf32>
    %257 = arith.addf %255, %256 : vector<8x64xf32>
    %258 = math.tanh %257 : vector<8x64xf32>
    %259 = arith.mulf %252, %258 : vector<8x64xf32>
    %c4_i32 = arith.constant 4 : i32
    %c8_i32_94 = arith.constant 8 : i32
    %260 = arith.muli %c4_i32, %c8_i32_94 : i32
    %261 = tpu.assume_multiple %260, 8 : i32
    %262 = arith.index_cast %261 : i32 to index
    %c0_95 = arith.constant 0 : index
    %263 = vector.load %arg9[%262, %c0_95] : memref<64x256xf32, #tpu.memory_space<vmem>>, vector<8x256xf32>
    %c0_96 = arith.constant 0 : index
    %c0_97 = arith.constant 0 : index
    %264 = vector.load %arg2[%c0_96, %c0_97] : memref<64x256xf32, #tpu.memory_space<vmem>>, vector<64x256xf32>
    %cst_98 = arith.constant dense<0.000000e+00> : vector<8x256xf32>
    %265 = tpu.matmul %229, %264, %cst_98 {dimension_numbers = #tpu.dot_dimension_numbers<[1], [0], [0], [1], [0, 0, 1, 1], [], []>} : vector<8x64xf32>, vector<64x256xf32>, vector<8x256xf32> -> vector<8x256xf32>
    %266 = arith.addf %263, %265 : vector<8x256xf32>
    %267 = vector.extract_strided_slice %266 {offsets = [0, 0], sizes = [8, 128], strides = [1, 1]} : vector<8x256xf32> to vector<8x128xf32>
    %cst_99 = arith.constant 5.000000e-01 : f32
    %268 = vector.broadcast %cst_99 : f32 to vector<8x128xf32>
    %269 = arith.mulf %268, %267 : vector<8x128xf32>
    %270 = math.tanh %269 : vector<8x128xf32>
    %cst_100 = arith.constant 5.000000e-01 : f32
    %271 = vector.broadcast %cst_100 : f32 to vector<8x128xf32>
    %272 = arith.mulf %271, %270 : vector<8x128xf32>
    %cst_101 = arith.constant 5.000000e-01 : f32
    %273 = vector.broadcast %cst_101 : f32 to vector<8x128xf32>
    %274 = arith.addf %272, %273 : vector<8x128xf32>
    %275 = vector.extract_strided_slice %266 {offsets = [0, 128], sizes = [8, 64], strides = [1, 1]} : vector<8x256xf32> to vector<8x64xf32>
    %276 = math.tanh %275 : vector<8x64xf32>
    %277 = vector.extract_strided_slice %266 {offsets = [0, 192], sizes = [8, 64], strides = [1, 1]} : vector<8x256xf32> to vector<8x64xf32>
    %cst_102 = arith.constant 5.000000e-01 : f32
    %278 = vector.broadcast %cst_102 : f32 to vector<8x64xf32>
    %279 = arith.mulf %278, %277 : vector<8x64xf32>
    %280 = math.tanh %279 : vector<8x64xf32>
    %cst_103 = arith.constant 5.000000e-01 : f32
    %281 = vector.broadcast %cst_103 : f32 to vector<8x64xf32>
    %282 = arith.mulf %281, %280 : vector<8x64xf32>
    %cst_104 = arith.constant 5.000000e-01 : f32
    %283 = vector.broadcast %cst_104 : f32 to vector<8x64xf32>
    %284 = arith.addf %282, %283 : vector<8x64xf32>
    %285 = vector.extract_strided_slice %274 {offsets = [0, 0], sizes = [8, 64], strides = [1, 1]} : vector<8x128xf32> to vector<8x64xf32>
    %286 = vector.extract_strided_slice %274 {offsets = [0, 64], sizes = [8, 64], strides = [1, 1]} : vector<8x128xf32> to vector<8x64xf32>
    %287 = arith.mulf %286, %227 : vector<8x64xf32>
    %288 = arith.mulf %285, %276 : vector<8x64xf32>
    %289 = arith.addf %287, %288 : vector<8x64xf32>
    %290 = math.tanh %289 : vector<8x64xf32>
    %291 = arith.mulf %284, %290 : vector<8x64xf32>
    %292 = tpu.concatenate %291, %259 in 1 : vector<8x64xf32>, vector<8x64xf32> -> vector<8x128xf32>
    %c0_105 = arith.constant 0 : index
    %c0_106 = arith.constant 0 : index
    %c0_107 = arith.constant 0 : index
    %293 = vector.load %arg4[%c0_105, %c0_106, %c0_107] : memref<1x128x256xf32, #tpu.memory_space<vmem>>, vector<1x128x256xf32>
    %294 = vector.shape_cast %293 : vector<1x128x256xf32> to vector<128x256xf32>
    %cst_108 = arith.constant dense<0.000000e+00> : vector<8x256xf32>
    %295 = tpu.matmul %292, %294, %cst_108 {dimension_numbers = #tpu.dot_dimension_numbers<[1], [0], [0], [1], [0, 0, 1, 1], [], []>} : vector<8x128xf32>, vector<128x256xf32>, vector<8x256xf32> -> vector<8x256xf32>
    %296 = arith.addf %295, %10 : vector<8x256xf32>
    %297 = vector.extract_strided_slice %296 {offsets = [0, 0], sizes = [8, 128], strides = [1, 1]} : vector<8x256xf32> to vector<8x128xf32>
    %cst_109 = arith.constant 5.000000e-01 : f32
    %298 = vector.broadcast %cst_109 : f32 to vector<8x128xf32>
    %299 = arith.mulf %298, %297 : vector<8x128xf32>
    %300 = math.tanh %299 : vector<8x128xf32>
    %cst_110 = arith.constant 5.000000e-01 : f32
    %301 = vector.broadcast %cst_110 : f32 to vector<8x128xf32>
    %302 = arith.mulf %301, %300 : vector<8x128xf32>
    %cst_111 = arith.constant 5.000000e-01 : f32
    %303 = vector.broadcast %cst_111 : f32 to vector<8x128xf32>
    %304 = arith.addf %302, %303 : vector<8x128xf32>
    %305 = vector.extract_strided_slice %296 {offsets = [0, 128], sizes = [8, 64], strides = [1, 1]} : vector<8x256xf32> to vector<8x64xf32>
    %306 = math.tanh %305 : vector<8x64xf32>
    %307 = vector.extract_strided_slice %296 {offsets = [0, 192], sizes = [8, 64], strides = [1, 1]} : vector<8x256xf32> to vector<8x64xf32>
    %cst_112 = arith.constant 5.000000e-01 : f32
    %308 = vector.broadcast %cst_112 : f32 to vector<8x64xf32>
    %309 = arith.mulf %308, %307 : vector<8x64xf32>
    %310 = math.tanh %309 : vector<8x64xf32>
    %cst_113 = arith.constant 5.000000e-01 : f32
    %311 = vector.broadcast %cst_113 : f32 to vector<8x64xf32>
    %312 = arith.mulf %311, %310 : vector<8x64xf32>
    %cst_114 = arith.constant 5.000000e-01 : f32
    %313 = vector.broadcast %cst_114 : f32 to vector<8x64xf32>
    %314 = arith.addf %312, %313 : vector<8x64xf32>
    %315 = vector.extract_strided_slice %304 {offsets = [0, 0], sizes = [8, 64], strides = [1, 1]} : vector<8x128xf32> to vector<8x64xf32>
    %316 = vector.extract_strided_slice %304 {offsets = [0, 64], sizes = [8, 64], strides = [1, 1]} : vector<8x128xf32> to vector<8x64xf32>
    %317 = arith.mulf %316, %257 : vector<8x64xf32>
    %318 = arith.mulf %315, %306 : vector<8x64xf32>
    %319 = arith.addf %317, %318 : vector<8x64xf32>
    %320 = math.tanh %319 : vector<8x64xf32>
    %321 = arith.mulf %314, %320 : vector<8x64xf32>
    %c5_i32 = arith.constant 5 : i32
    %c8_i32_115 = arith.constant 8 : i32
    %322 = arith.muli %c5_i32, %c8_i32_115 : i32
    %323 = tpu.assume_multiple %322, 8 : i32
    %324 = arith.index_cast %323 : i32 to index
    %c0_116 = arith.constant 0 : index
    %325 = vector.load %arg9[%324, %c0_116] : memref<64x256xf32, #tpu.memory_space<vmem>>, vector<8x256xf32>
    %c0_117 = arith.constant 0 : index
    %c0_118 = arith.constant 0 : index
    %326 = vector.load %arg2[%c0_117, %c0_118] : memref<64x256xf32, #tpu.memory_space<vmem>>, vector<64x256xf32>
    %cst_119 = arith.constant dense<0.000000e+00> : vector<8x256xf32>
    %327 = tpu.matmul %291, %326, %cst_119 {dimension_numbers = #tpu.dot_dimension_numbers<[1], [0], [0], [1], [0, 0, 1, 1], [], []>} : vector<8x64xf32>, vector<64x256xf32>, vector<8x256xf32> -> vector<8x256xf32>
    %328 = arith.addf %325, %327 : vector<8x256xf32>
    %329 = vector.extract_strided_slice %328 {offsets = [0, 0], sizes = [8, 128], strides = [1, 1]} : vector<8x256xf32> to vector<8x128xf32>
    %cst_120 = arith.constant 5.000000e-01 : f32
    %330 = vector.broadcast %cst_120 : f32 to vector<8x128xf32>
    %331 = arith.mulf %330, %329 : vector<8x128xf32>
    %332 = math.tanh %331 : vector<8x128xf32>
    %cst_121 = arith.constant 5.000000e-01 : f32
    %333 = vector.broadcast %cst_121 : f32 to vector<8x128xf32>
    %334 = arith.mulf %333, %332 : vector<8x128xf32>
    %cst_122 = arith.constant 5.000000e-01 : f32
    %335 = vector.broadcast %cst_122 : f32 to vector<8x128xf32>
    %336 = arith.addf %334, %335 : vector<8x128xf32>
    %337 = vector.extract_strided_slice %328 {offsets = [0, 128], sizes = [8, 64], strides = [1, 1]} : vector<8x256xf32> to vector<8x64xf32>
    %338 = math.tanh %337 : vector<8x64xf32>
    %339 = vector.extract_strided_slice %328 {offsets = [0, 192], sizes = [8, 64], strides = [1, 1]} : vector<8x256xf32> to vector<8x64xf32>
    %cst_123 = arith.constant 5.000000e-01 : f32
    %340 = vector.broadcast %cst_123 : f32 to vector<8x64xf32>
    %341 = arith.mulf %340, %339 : vector<8x64xf32>
    %342 = math.tanh %341 : vector<8x64xf32>
    %cst_124 = arith.constant 5.000000e-01 : f32
    %343 = vector.broadcast %cst_124 : f32 to vector<8x64xf32>
    %344 = arith.mulf %343, %342 : vector<8x64xf32>
    %cst_125 = arith.constant 5.000000e-01 : f32
    %345 = vector.broadcast %cst_125 : f32 to vector<8x64xf32>
    %346 = arith.addf %344, %345 : vector<8x64xf32>
    %347 = vector.extract_strided_slice %336 {offsets = [0, 0], sizes = [8, 64], strides = [1, 1]} : vector<8x128xf32> to vector<8x64xf32>
    %348 = vector.extract_strided_slice %336 {offsets = [0, 64], sizes = [8, 64], strides = [1, 1]} : vector<8x128xf32> to vector<8x64xf32>
    %349 = arith.mulf %348, %289 : vector<8x64xf32>
    %350 = arith.mulf %347, %338 : vector<8x64xf32>
    %351 = arith.addf %349, %350 : vector<8x64xf32>
    %352 = math.tanh %351 : vector<8x64xf32>
    %353 = arith.mulf %346, %352 : vector<8x64xf32>
    %354 = tpu.concatenate %353, %321 in 1 : vector<8x64xf32>, vector<8x64xf32> -> vector<8x128xf32>
    %c0_126 = arith.constant 0 : index
    %c0_127 = arith.constant 0 : index
    %c0_128 = arith.constant 0 : index
    %355 = vector.load %arg4[%c0_126, %c0_127, %c0_128] : memref<1x128x256xf32, #tpu.memory_space<vmem>>, vector<1x128x256xf32>
    %356 = vector.shape_cast %355 : vector<1x128x256xf32> to vector<128x256xf32>
    %cst_129 = arith.constant dense<0.000000e+00> : vector<8x256xf32>
    %357 = tpu.matmul %354, %356, %cst_129 {dimension_numbers = #tpu.dot_dimension_numbers<[1], [0], [0], [1], [0, 0, 1, 1], [], []>} : vector<8x128xf32>, vector<128x256xf32>, vector<8x256xf32> -> vector<8x256xf32>
    %358 = arith.addf %357, %10 : vector<8x256xf32>
    %359 = vector.extract_strided_slice %358 {offsets = [0, 0], sizes = [8, 128], strides = [1, 1]} : vector<8x256xf32> to vector<8x128xf32>
    %cst_130 = arith.constant 5.000000e-01 : f32
    %360 = vector.broadcast %cst_130 : f32 to vector<8x128xf32>
    %361 = arith.mulf %360, %359 : vector<8x128xf32>
    %362 = math.tanh %361 : vector<8x128xf32>
    %cst_131 = arith.constant 5.000000e-01 : f32
    %363 = vector.broadcast %cst_131 : f32 to vector<8x128xf32>
    %364 = arith.mulf %363, %362 : vector<8x128xf32>
    %cst_132 = arith.constant 5.000000e-01 : f32
    %365 = vector.broadcast %cst_132 : f32 to vector<8x128xf32>
    %366 = arith.addf %364, %365 : vector<8x128xf32>
    %367 = vector.extract_strided_slice %358 {offsets = [0, 128], sizes = [8, 64], strides = [1, 1]} : vector<8x256xf32> to vector<8x64xf32>
    %368 = math.tanh %367 : vector<8x64xf32>
    %369 = vector.extract_strided_slice %358 {offsets = [0, 192], sizes = [8, 64], strides = [1, 1]} : vector<8x256xf32> to vector<8x64xf32>
    %cst_133 = arith.constant 5.000000e-01 : f32
    %370 = vector.broadcast %cst_133 : f32 to vector<8x64xf32>
    %371 = arith.mulf %370, %369 : vector<8x64xf32>
    %372 = math.tanh %371 : vector<8x64xf32>
    %cst_134 = arith.constant 5.000000e-01 : f32
    %373 = vector.broadcast %cst_134 : f32 to vector<8x64xf32>
    %374 = arith.mulf %373, %372 : vector<8x64xf32>
    %cst_135 = arith.constant 5.000000e-01 : f32
    %375 = vector.broadcast %cst_135 : f32 to vector<8x64xf32>
    %376 = arith.addf %374, %375 : vector<8x64xf32>
    %377 = vector.extract_strided_slice %366 {offsets = [0, 0], sizes = [8, 64], strides = [1, 1]} : vector<8x128xf32> to vector<8x64xf32>
    %378 = vector.extract_strided_slice %366 {offsets = [0, 64], sizes = [8, 64], strides = [1, 1]} : vector<8x128xf32> to vector<8x64xf32>
    %379 = arith.mulf %378, %319 : vector<8x64xf32>
    %380 = arith.mulf %377, %368 : vector<8x64xf32>
    %381 = arith.addf %379, %380 : vector<8x64xf32>
    %382 = math.tanh %381 : vector<8x64xf32>
    %383 = arith.mulf %376, %382 : vector<8x64xf32>
    %c6_i32 = arith.constant 6 : i32
    %c8_i32_136 = arith.constant 8 : i32
    %384 = arith.muli %c6_i32, %c8_i32_136 : i32
    %385 = tpu.assume_multiple %384, 8 : i32
    %386 = arith.index_cast %385 : i32 to index
    %c0_137 = arith.constant 0 : index
    %387 = vector.load %arg9[%386, %c0_137] : memref<64x256xf32, #tpu.memory_space<vmem>>, vector<8x256xf32>
    %c0_138 = arith.constant 0 : index
    %c0_139 = arith.constant 0 : index
    %388 = vector.load %arg2[%c0_138, %c0_139] : memref<64x256xf32, #tpu.memory_space<vmem>>, vector<64x256xf32>
    %cst_140 = arith.constant dense<0.000000e+00> : vector<8x256xf32>
    %389 = tpu.matmul %353, %388, %cst_140 {dimension_numbers = #tpu.dot_dimension_numbers<[1], [0], [0], [1], [0, 0, 1, 1], [], []>} : vector<8x64xf32>, vector<64x256xf32>, vector<8x256xf32> -> vector<8x256xf32>
    %390 = arith.addf %387, %389 : vector<8x256xf32>
    %391 = vector.extract_strided_slice %390 {offsets = [0, 0], sizes = [8, 128], strides = [1, 1]} : vector<8x256xf32> to vector<8x128xf32>
    %cst_141 = arith.constant 5.000000e-01 : f32
    %392 = vector.broadcast %cst_141 : f32 to vector<8x128xf32>
    %393 = arith.mulf %392, %391 : vector<8x128xf32>
    %394 = math.tanh %393 : vector<8x128xf32>
    %cst_142 = arith.constant 5.000000e-01 : f32
    %395 = vector.broadcast %cst_142 : f32 to vector<8x128xf32>
    %396 = arith.mulf %395, %394 : vector<8x128xf32>
    %cst_143 = arith.constant 5.000000e-01 : f32
    %397 = vector.broadcast %cst_143 : f32 to vector<8x128xf32>
    %398 = arith.addf %396, %397 : vector<8x128xf32>
    %399 = vector.extract_strided_slice %390 {offsets = [0, 128], sizes = [8, 64], strides = [1, 1]} : vector<8x256xf32> to vector<8x64xf32>
    %400 = math.tanh %399 : vector<8x64xf32>
    %401 = vector.extract_strided_slice %390 {offsets = [0, 192], sizes = [8, 64], strides = [1, 1]} : vector<8x256xf32> to vector<8x64xf32>
    %cst_144 = arith.constant 5.000000e-01 : f32
    %402 = vector.broadcast %cst_144 : f32 to vector<8x64xf32>
    %403 = arith.mulf %402, %401 : vector<8x64xf32>
    %404 = math.tanh %403 : vector<8x64xf32>
    %cst_145 = arith.constant 5.000000e-01 : f32
    %405 = vector.broadcast %cst_145 : f32 to vector<8x64xf32>
    %406 = arith.mulf %405, %404 : vector<8x64xf32>
    %cst_146 = arith.constant 5.000000e-01 : f32
    %407 = vector.broadcast %cst_146 : f32 to vector<8x64xf32>
    %408 = arith.addf %406, %407 : vector<8x64xf32>
    %409 = vector.extract_strided_slice %398 {offsets = [0, 0], sizes = [8, 64], strides = [1, 1]} : vector<8x128xf32> to vector<8x64xf32>
    %410 = vector.extract_strided_slice %398 {offsets = [0, 64], sizes = [8, 64], strides = [1, 1]} : vector<8x128xf32> to vector<8x64xf32>
    %411 = arith.mulf %410, %351 : vector<8x64xf32>
    %412 = arith.mulf %409, %400 : vector<8x64xf32>
    %413 = arith.addf %411, %412 : vector<8x64xf32>
    %414 = math.tanh %413 : vector<8x64xf32>
    %415 = arith.mulf %408, %414 : vector<8x64xf32>
    %416 = tpu.concatenate %415, %383 in 1 : vector<8x64xf32>, vector<8x64xf32> -> vector<8x128xf32>
    %c0_147 = arith.constant 0 : index
    %c0_148 = arith.constant 0 : index
    %c0_149 = arith.constant 0 : index
    %417 = vector.load %arg4[%c0_147, %c0_148, %c0_149] : memref<1x128x256xf32, #tpu.memory_space<vmem>>, vector<1x128x256xf32>
    %418 = vector.shape_cast %417 : vector<1x128x256xf32> to vector<128x256xf32>
    %cst_150 = arith.constant dense<0.000000e+00> : vector<8x256xf32>
    %419 = tpu.matmul %416, %418, %cst_150 {dimension_numbers = #tpu.dot_dimension_numbers<[1], [0], [0], [1], [0, 0, 1, 1], [], []>} : vector<8x128xf32>, vector<128x256xf32>, vector<8x256xf32> -> vector<8x256xf32>
    %420 = arith.addf %419, %10 : vector<8x256xf32>
    %421 = vector.extract_strided_slice %420 {offsets = [0, 0], sizes = [8, 128], strides = [1, 1]} : vector<8x256xf32> to vector<8x128xf32>
    %cst_151 = arith.constant 5.000000e-01 : f32
    %422 = vector.broadcast %cst_151 : f32 to vector<8x128xf32>
    %423 = arith.mulf %422, %421 : vector<8x128xf32>
    %424 = math.tanh %423 : vector<8x128xf32>
    %cst_152 = arith.constant 5.000000e-01 : f32
    %425 = vector.broadcast %cst_152 : f32 to vector<8x128xf32>
    %426 = arith.mulf %425, %424 : vector<8x128xf32>
    %cst_153 = arith.constant 5.000000e-01 : f32
    %427 = vector.broadcast %cst_153 : f32 to vector<8x128xf32>
    %428 = arith.addf %426, %427 : vector<8x128xf32>
    %429 = vector.extract_strided_slice %420 {offsets = [0, 128], sizes = [8, 64], strides = [1, 1]} : vector<8x256xf32> to vector<8x64xf32>
    %430 = math.tanh %429 : vector<8x64xf32>
    %431 = vector.extract_strided_slice %420 {offsets = [0, 192], sizes = [8, 64], strides = [1, 1]} : vector<8x256xf32> to vector<8x64xf32>
    %cst_154 = arith.constant 5.000000e-01 : f32
    %432 = vector.broadcast %cst_154 : f32 to vector<8x64xf32>
    %433 = arith.mulf %432, %431 : vector<8x64xf32>
    %434 = math.tanh %433 : vector<8x64xf32>
    %cst_155 = arith.constant 5.000000e-01 : f32
    %435 = vector.broadcast %cst_155 : f32 to vector<8x64xf32>
    %436 = arith.mulf %435, %434 : vector<8x64xf32>
    %cst_156 = arith.constant 5.000000e-01 : f32
    %437 = vector.broadcast %cst_156 : f32 to vector<8x64xf32>
    %438 = arith.addf %436, %437 : vector<8x64xf32>
    %439 = vector.extract_strided_slice %428 {offsets = [0, 0], sizes = [8, 64], strides = [1, 1]} : vector<8x128xf32> to vector<8x64xf32>
    %440 = vector.extract_strided_slice %428 {offsets = [0, 64], sizes = [8, 64], strides = [1, 1]} : vector<8x128xf32> to vector<8x64xf32>
    %441 = arith.mulf %440, %381 : vector<8x64xf32>
    %442 = arith.mulf %439, %430 : vector<8x64xf32>
    %443 = arith.addf %441, %442 : vector<8x64xf32>
    %444 = math.tanh %443 : vector<8x64xf32>
    %445 = arith.mulf %438, %444 : vector<8x64xf32>
    %c7_i32 = arith.constant 7 : i32
    %c8_i32_157 = arith.constant 8 : i32
    %446 = arith.muli %c7_i32, %c8_i32_157 : i32
    %447 = tpu.assume_multiple %446, 8 : i32
    %448 = arith.index_cast %447 : i32 to index
    %c0_158 = arith.constant 0 : index
    %449 = vector.load %arg9[%448, %c0_158] : memref<64x256xf32, #tpu.memory_space<vmem>>, vector<8x256xf32>
    %c0_159 = arith.constant 0 : index
    %c0_160 = arith.constant 0 : index
    %450 = vector.load %arg2[%c0_159, %c0_160] : memref<64x256xf32, #tpu.memory_space<vmem>>, vector<64x256xf32>
    %cst_161 = arith.constant dense<0.000000e+00> : vector<8x256xf32>
    %451 = tpu.matmul %415, %450, %cst_161 {dimension_numbers = #tpu.dot_dimension_numbers<[1], [0], [0], [1], [0, 0, 1, 1], [], []>} : vector<8x64xf32>, vector<64x256xf32>, vector<8x256xf32> -> vector<8x256xf32>
    %452 = arith.addf %449, %451 : vector<8x256xf32>
    %453 = vector.extract_strided_slice %452 {offsets = [0, 0], sizes = [8, 128], strides = [1, 1]} : vector<8x256xf32> to vector<8x128xf32>
    %cst_162 = arith.constant 5.000000e-01 : f32
    %454 = vector.broadcast %cst_162 : f32 to vector<8x128xf32>
    %455 = arith.mulf %454, %453 : vector<8x128xf32>
    %456 = math.tanh %455 : vector<8x128xf32>
    %cst_163 = arith.constant 5.000000e-01 : f32
    %457 = vector.broadcast %cst_163 : f32 to vector<8x128xf32>
    %458 = arith.mulf %457, %456 : vector<8x128xf32>
    %cst_164 = arith.constant 5.000000e-01 : f32
    %459 = vector.broadcast %cst_164 : f32 to vector<8x128xf32>
    %460 = arith.addf %458, %459 : vector<8x128xf32>
    %461 = vector.extract_strided_slice %452 {offsets = [0, 128], sizes = [8, 64], strides = [1, 1]} : vector<8x256xf32> to vector<8x64xf32>
    %462 = math.tanh %461 : vector<8x64xf32>
    %463 = vector.extract_strided_slice %452 {offsets = [0, 192], sizes = [8, 64], strides = [1, 1]} : vector<8x256xf32> to vector<8x64xf32>
    %cst_165 = arith.constant 5.000000e-01 : f32
    %464 = vector.broadcast %cst_165 : f32 to vector<8x64xf32>
    %465 = arith.mulf %464, %463 : vector<8x64xf32>
    %466 = math.tanh %465 : vector<8x64xf32>
    %cst_166 = arith.constant 5.000000e-01 : f32
    %467 = vector.broadcast %cst_166 : f32 to vector<8x64xf32>
    %468 = arith.mulf %467, %466 : vector<8x64xf32>
    %cst_167 = arith.constant 5.000000e-01 : f32
    %469 = vector.broadcast %cst_167 : f32 to vector<8x64xf32>
    %470 = arith.addf %468, %469 : vector<8x64xf32>
    %471 = vector.extract_strided_slice %460 {offsets = [0, 0], sizes = [8, 64], strides = [1, 1]} : vector<8x128xf32> to vector<8x64xf32>
    %472 = vector.extract_strided_slice %460 {offsets = [0, 64], sizes = [8, 64], strides = [1, 1]} : vector<8x128xf32> to vector<8x64xf32>
    %473 = arith.mulf %472, %413 : vector<8x64xf32>
    %474 = arith.mulf %471, %462 : vector<8x64xf32>
    %475 = arith.addf %473, %474 : vector<8x64xf32>
    %476 = math.tanh %475 : vector<8x64xf32>
    %477 = arith.mulf %470, %476 : vector<8x64xf32>
    %478 = tpu.concatenate %477, %445 in 1 : vector<8x64xf32>, vector<8x64xf32> -> vector<8x128xf32>
    %c0_168 = arith.constant 0 : index
    %c0_169 = arith.constant 0 : index
    %c0_170 = arith.constant 0 : index
    %479 = vector.load %arg4[%c0_168, %c0_169, %c0_170] : memref<1x128x256xf32, #tpu.memory_space<vmem>>, vector<1x128x256xf32>
    %480 = vector.shape_cast %479 : vector<1x128x256xf32> to vector<128x256xf32>
    %cst_171 = arith.constant dense<0.000000e+00> : vector<8x256xf32>
    %481 = tpu.matmul %478, %480, %cst_171 {dimension_numbers = #tpu.dot_dimension_numbers<[1], [0], [0], [1], [0, 0, 1, 1], [], []>} : vector<8x128xf32>, vector<128x256xf32>, vector<8x256xf32> -> vector<8x256xf32>
    %482 = arith.addf %481, %10 : vector<8x256xf32>
    %483 = vector.extract_strided_slice %482 {offsets = [0, 0], sizes = [8, 128], strides = [1, 1]} : vector<8x256xf32> to vector<8x128xf32>
    %cst_172 = arith.constant 5.000000e-01 : f32
    %484 = vector.broadcast %cst_172 : f32 to vector<8x128xf32>
    %485 = arith.mulf %484, %483 : vector<8x128xf32>
    %486 = math.tanh %485 : vector<8x128xf32>
    %cst_173 = arith.constant 5.000000e-01 : f32
    %487 = vector.broadcast %cst_173 : f32 to vector<8x128xf32>
    %488 = arith.mulf %487, %486 : vector<8x128xf32>
    %cst_174 = arith.constant 5.000000e-01 : f32
    %489 = vector.broadcast %cst_174 : f32 to vector<8x128xf32>
    %490 = arith.addf %488, %489 : vector<8x128xf32>
    %491 = vector.extract_strided_slice %482 {offsets = [0, 128], sizes = [8, 64], strides = [1, 1]} : vector<8x256xf32> to vector<8x64xf32>
    %492 = math.tanh %491 : vector<8x64xf32>
    %493 = vector.extract_strided_slice %482 {offsets = [0, 192], sizes = [8, 64], strides = [1, 1]} : vector<8x256xf32> to vector<8x64xf32>
    %cst_175 = arith.constant 5.000000e-01 : f32
    %494 = vector.broadcast %cst_175 : f32 to vector<8x64xf32>
    %495 = arith.mulf %494, %493 : vector<8x64xf32>
    %496 = math.tanh %495 : vector<8x64xf32>
    %cst_176 = arith.constant 5.000000e-01 : f32
    %497 = vector.broadcast %cst_176 : f32 to vector<8x64xf32>
    %498 = arith.mulf %497, %496 : vector<8x64xf32>
    %cst_177 = arith.constant 5.000000e-01 : f32
    %499 = vector.broadcast %cst_177 : f32 to vector<8x64xf32>
    %500 = arith.addf %498, %499 : vector<8x64xf32>
    %501 = vector.extract_strided_slice %490 {offsets = [0, 0], sizes = [8, 64], strides = [1, 1]} : vector<8x128xf32> to vector<8x64xf32>
    %502 = vector.extract_strided_slice %490 {offsets = [0, 64], sizes = [8, 64], strides = [1, 1]} : vector<8x128xf32> to vector<8x64xf32>
    %503 = arith.mulf %502, %443 : vector<8x64xf32>
    %504 = arith.mulf %501, %492 : vector<8x64xf32>
    %505 = arith.addf %503, %504 : vector<8x64xf32>
    %506 = math.tanh %505 : vector<8x64xf32>
    %507 = arith.mulf %500, %506 : vector<8x64xf32>
    %c8_i32_178 = arith.constant 8 : i32
    %c0_179 = arith.constant 0 : index
    %c0_180 = arith.constant 0 : index
    %508 = vector.load %arg6[%c0_179, %c0_180] : memref<64x128xf32, #tpu.memory_space<vmem>>, vector<64x128xf32>
    %cst_181 = arith.constant dense<0.000000e+00> : vector<8x128xf32>
    %509 = tpu.matmul %507, %508, %cst_181 {dimension_numbers = #tpu.dot_dimension_numbers<[1], [0], [0], [1], [0, 0, 1, 1], [], []>} : vector<8x64xf32>, vector<64x128xf32>, vector<8x128xf32> -> vector<8x128xf32>
    %c0_182 = arith.constant 0 : index
    %c0_183 = arith.constant 0 : index
    %510 = vector.load %arg7[%c0_182, %c0_183] : memref<1x128xf32, #tpu.memory_space<vmem>>, vector<1x128xf32>
    %511 = vector.broadcast %510 : vector<1x128xf32> to vector<8x128xf32>
    %512 = arith.addf %509, %511 : vector<8x128xf32>
    %c0_184 = arith.constant 0 : index
    %c0_185 = arith.constant 0 : index
    %513 = vector.load %arg8[%c0_184, %c0_185] : memref<8x128xf32, #tpu.memory_space<vmem>>, vector<8x128xf32>
    tpu.vector_store %arg8[%c0_184, %c0_185], %512 {strides = array<i32>} : memref<8x128xf32, #tpu.memory_space<vmem>>, vector<8x128xf32>,
    return
  }
}

</mosaic_0001>

<llo_original>
// kernel: lstm_classifier_forward.1
$region0: #{lstm_classifier_forward.1}
  #allocation0 [shape = 'u32[]', space=smem, size = 0x4, offset = 0x4, fixed_abs, tag = 'smem constant byte address 0x4 - core index']
  #allocation1 [shape = 'u32[144,128]{1,0:T(1,128)}', space=vmem, size = 0x12000, scoped, tag = 'internal scratch']
  #allocation2 [shape = 'f32[64,256]{1,0:T(8,128)}', space=vmem, size = 0x10000, scoped, tag = 'scratch operand']
  %s0 = inlined_call_operand.vmem [shape: f32[64,128], index: 0, kind: input, shape index: {}]
  %s1 = inlined_call_operand.hbm [shape: f32[128,256], index: 1, kind: input, shape index: {}]
  %s2 = inlined_call_operand.hbm [shape: f32[64,256], index: 2, kind: input, shape index: {}]
  %s3 = inlined_call_operand.vmem [shape: f32[1,256], index: 3, kind: input, shape index: {}]
  %s4 = inlined_call_operand.hbm [shape: f32[1,128,256], index: 4, kind: input, shape index: {}]
  %s5 = inlined_call_operand.vmem [shape: f32[1,1,256], index: 5, kind: input, shape index: {}]
  %s6 = inlined_call_operand.vmem [shape: f32[64,128], index: 6, kind: input, shape index: {}]
  %s7 = inlined_call_operand.vmem [shape: f32[1,128], index: 7, kind: input, shape index: {}]
  %s8 = inlined_call_operand.vmem [shape: f32[8,128], index: 8, kind: output, shape index: {}]
  %s9 = sld [smem:[#allocation0]]
  $region54: #{lstm_classifier_forward.1} parent=0
    _
  %s11 = ssub.s32 1, %s9
  %s12 = scalar_select 0, %s11, %s9
  $region1: #{lstm_classifier_forward.1} parent=0
    #allocation3 [shape = 'u8[131072]{0}', space=vmem, size = 0x20000, scoped, tag = 'input window, operand 1, single buffered']
    #allocation4 [shape = 's32[1]{0}', space=sflag, size = 0x4, scoped, tag = 'scoped memory for lstm_classifier_forward.1']
    #allocation5 [shape = 'u8[65536]{0}', space=vmem, size = 0x10000, scoped, tag = 'input window, operand 2, single buffered']
    #allocation6 [shape = 's32[1]{0}', space=sflag, size = 0x4, scoped, tag = 'scoped memory for lstm_classifier_forward.1']
    #allocation7 [shape = 'u8[131072]{0}', space=vmem, size = 0x20000, scoped, tag = 'input window, operand 4, single buffered']
    %13 = vsyncpa [#allocation4], 0
    %14 = vsyncpa [#allocation6], 0
    // Predicated region
    $region2: #{lstm_classifier_forward.1} parent=1 // pred_check
      _
    $region3: #{lstm_classifier_forward.1} parent=1 // pred_check_branch
      %16 = sbr.rel (0) target = $region5
    $region4: #{lstm_classifier_forward.1} parent=1 // pred_region
      _
    $region5: #{lstm_classifier_forward.1} parent=1 // pred_fallthru
      _
    // Predicated region
    $region6: #{lstm_classifier_forward.1} parent=1 // pred_check
      _
    $region7: #{lstm_classifier_forward.1} parent=1 // pred_check_branch
      %18 = sbr.rel (0) target = $region9
    $region8: #{lstm_classifier_forward.1} parent=1 // pred_region
      %s20 = ssub.s32 4096, 4096
      %21 = vsyncadd [#allocation4], %s20
      %s22 = sshll.u32 [#allocation3], 4
      %s23 = int_to_ptr.vmem [resolvable:$true] %s22
      %28 = dma.hbm_to_vmem [thread:$0]  %s1, 4096, %s23, [#allocation4], 256, 256, 16
    $region9: #{lstm_classifier_forward.1} parent=1 // pred_fallthru
      _
    // Predicated region
    $region10: #{lstm_classifier_forward.1} parent=1 // pred_check
      _
    $region11: #{lstm_classifier_forward.1} parent=1 // pred_check_branch
      %30 = sbr.rel (0) target = $region13
    $region12: #{lstm_classifier_forward.1} parent=1 // pred_region
      %s32 = ssub.s32 2048, 2048
      %33 = vsyncadd [#allocation6], %s32
      %s34 = sshll.u32 [#allocation5], 4
      %s35 = int_to_ptr.vmem [resolvable:$true] %s34
      %40 = dma.hbm_to_vmem [thread:$0]  %s2, 2048, %s35, [#allocation6], 256, 256, 16
    $region13: #{lstm_classifier_forward.1} parent=1 // pred_fallthru
      _
    // Predicated region
    $region14: #{lstm_classifier_forward.1} parent=1 // pred_check
      _
    $region15: #{lstm_classifier_forward.1} parent=1 // pred_check_branch
      %42 = sbr.rel (0) target = $region17
    $region16: #{lstm_classifier_forward.1} parent=1 // pred_region
      _
    $region17: #{lstm_classifier_forward.1} parent=1 // pred_fallthru
      _
    // Predicated region
    $region18: #{lstm_classifier_forward.1} parent=1 // pred_check
      _
    $region19: #{lstm_classifier_forward.1} parent=1 // pred_check_branch
      %44 = sbr.rel (0) target = $region21
    $region20: #{lstm_classifier_forward.1} parent=1 // pred_region
      %s46 = ssub.s32 4096, 4096
      %47 = vsyncadd [#allocation6], %s46
      %s48 = sshll.u32 [#allocation7], 4
      %s49 = int_to_ptr.vmem [resolvable:$true] %s48
      %54 = dma.hbm_to_vmem [thread:$0]  %s4, 4096, %s49, [#allocation6], 256, 256, 16
    $region21: #{lstm_classifier_forward.1} parent=1 // pred_fallthru
      _
    // Predicated region
    $region22: #{lstm_classifier_forward.1} parent=1 // pred_check
      _
    $region23: #{lstm_classifier_forward.1} parent=1 // pred_check_branch
      %56 = sbr.rel (0) target = $region25
    $region24: #{lstm_classifier_forward.1} parent=1 // pred_region
      _
    $region25: #{lstm_classifier_forward.1} parent=1 // pred_fallthru
      _
    // Predicated region
    $region26: #{lstm_classifier_forward.1} parent=1 // pred_check
      _
    $region27: #{lstm_classifier_forward.1} parent=1 // pred_check_branch
      %58 = sbr.rel (0) target = $region29
    $region28: #{lstm_classifier_forward.1} parent=1 // pred_region
      _
    $region29: #{lstm_classifier_forward.1} parent=1 // pred_fallthru
      _
    // Predicated region
    $region30: #{lstm_classifier_forward.1} parent=1 // pred_check
      _
    $region31: #{lstm_classifier_forward.1} parent=1 // pred_check_branch
      %60 = sbr.rel (0) target = $region33
    $region32: #{lstm_classifier_forward.1} parent=1 // pred_region
      _
    $region33: #{lstm_classifier_forward.1} parent=1 // pred_fallthru
      _
    // Predicated region
    $region34: #{lstm_classifier_forward.1} parent=1 // pred_check
      _
    $region35: #{lstm_classifier_forward.1} parent=1 // pred_check_branch
      %62 = sbr.rel (0) target = $region37
    $region36: #{lstm_classifier_forward.1} parent=1 // pred_region
      %63 = dma.done [#allocation4], 4096
    $region37: #{lstm_classifier_forward.1} parent=1 // pred_fallthru
      _
    // Predicated region
    $region38: #{lstm_classifier_forward.1} parent=1 // pred_check
      _
    $region39: #{lstm_classifier_forward.1} parent=1 // pred_check_branch
      %65 = sbr.rel (0) target = $region41
    $region40: #{lstm_classifier_forward.1} parent=1 // pred_region
      %66 = dma.done [#allocation6], 2048
    $region41: #{lstm_classifier_forward.1} parent=1 // pred_fallthru
      _
    // Predicated region
    $region42: #{lstm_classifier_forward.1} parent=1 // pred_check
      _
    $region43: #{lstm_classifier_forward.1} parent=1 // pred_check_branch
      %68 = sbr.rel (0) target = $region45
    $region44: #{lstm_classifier_forward.1} parent=1 // pred_region
      %69 = dma.done [#allocation6], 4096
    $region45: #{lstm_classifier_forward.1} parent=1 // pred_fallthru
      _
    %v70 = vld [vmem:[%s0] sm:$0xff]
    %v71 = vld [vmem:[%s0 + $0x8] sm:$0xff]
    %v72 = vld [vmem:[%s0 + $0x10] sm:$0xff]
    %v73 = vld [vmem:[%s0 + $0x18] sm:$0xff]
    %v74 = vld [vmem:[%s0 + $0x20] sm:$0xff]
    %v75 = vld [vmem:[%s0 + $0x28] sm:$0xff]
    %v76 = vld [vmem:[%s0 + $0x30] sm:$0xff]
    %v77 = vld [vmem:[%s0 + $0x38] sm:$0xff]
    %v78 = vld [vmem:[#allocation3] sm:$0xff]
    %v79 = vld [vmem:[#allocation3 + $0x8] sm:$0xff]
    %v80 = vld [vmem:[#allocation3 + $0x10] sm:$0xff]
    %v81 = vld [vmem:[#allocation3 + $0x18] sm:$0xff]
    %v82 = vld [vmem:[#allocation3 + $0x20] sm:$0xff]
    %v83 = vld [vmem:[#allocation3 + $0x28] sm:$0xff]
    %v84 = vld [vmem:[#allocation3 + $0x30] sm:$0xff]
    %v85 = vld [vmem:[#allocation3 + $0x38] sm:$0xff]
    %v86 = vld [vmem:[#allocation3 + $0x40] sm:$0xff]
    %v87 = vld [vmem:[#allocation3 + $0x48] sm:$0xff]
    %v88 = vld [vmem:[#allocation3 + $0x50] sm:$0xff]
    %v89 = vld [vmem:[#allocation3 + $0x58] sm:$0xff]
    %v90 = vld [vmem:[#allocation3 + $0x60] sm:$0xff]
    %v91 = vld [vmem:[#allocation3 + $0x68] sm:$0xff]
    %v92 = vld [vmem:[#allocation3 + $0x70] sm:$0xff]
    %v93 = vld [vmem:[#allocation3 + $0x78] sm:$0xff]
    %v94 = vld [vmem:[#allocation3 + $0x80] sm:$0xff]
    %v95 = vld [vmem:[#allocation3 + $0x88] sm:$0xff]
    %v96 = vld [vmem:[#allocation3 + $0x90] sm:$0xff]
    %v97 = vld [vmem:[#allocation3 + $0x98] sm:$0xff]
    %v98 = vld [vmem:[#allocation3 + $0xa0] sm:$0xff]
    %v99 = vld [vmem:[#allocation3 + $0xa8] sm:$0xff]
    %v100 = vld [vmem:[#allocation3 + $0xb0] sm:$0xff]
    %v101 = vld [vmem:[#allocation3 + $0xb8] sm:$0xff]
    %v102 = vld [vmem:[#allocation3 + $0xc0] sm:$0xff]
    %v103 = vld [vmem:[#allocation3 + $0xc8] sm:$0xff]
    %v104 = vld [vmem:[#allocation3 + $0xd0] sm:$0xff]
    %v105 = vld [vmem:[#allocation3 + $0xd8] sm:$0xff]
    %v106 = vld [vmem:[#allocation3 + $0xe0] sm:$0xff]
    %v107 = vld [vmem:[#allocation3 + $0xe8] sm:$0xff]
    %v108 = vld [vmem:[#allocation3 + $0xf0] sm:$0xff]
    %v109 = vld [vmem:[#allocation3 + $0xf8] sm:$0xff]
    %v110 = vld [vmem:[%s3] sm:$0x3]
    %v112 = vlaneseq
    %v113 = vshrl.u32 %v112, 7
    %v114 = vsub.s32 0, %v113
    %v115 = vrot.slane %v110, %v114
    %v116 = vlaneseq
    %v117 = vshrl.u32 %v116, 7
    %v118 = vsub.s32 1, %v117
    %v119 = vrot.slane %v110, %v118
    %122 = vmatprep.subr.mxu0 %v109
    %123 = vmatpush1.msra.mxu0 %v108
    %124 = vmatprep.subr.mxu0 %v107
    %125 = vmatpush1.msra.mxu0 %v106
    %126 = vmatprep.subr.mxu0 %v105
    %127 = vmatpush1.msra.mxu0 %v104
    %128 = vmatprep.subr.mxu0 %v103
    %129 = vmatpush1.msra.mxu0 %v102
    %130 = vmatprep.subr.mxu0 %v101
    %131 = vmatpush1.msra.mxu0 %v100
    %132 = vmatprep.subr.mxu0 %v99
    %133 = vmatpush1.msra.mxu0 %v98
    %134 = vmatprep.subr.mxu0 %v97
    %135 = vmatpush1.msra.mxu0 %v96
    %136 = vmatprep.subr.mxu0 %v95
    %137 = vmatpush1.msra.mxu0 %v94
    %138 = vmatprep.subr.mxu0 %v93
    %139 = vmatpush1.msra.mxu0 %v92
    %140 = vmatprep.subr.mxu0 %v91
    %141 = vmatpush1.msra.mxu0 %v90
    %142 = vmatprep.subr.mxu0 %v89
    %143 = vmatpush1.msra.mxu0 %v88
    %144 = vmatprep.subr.mxu0 %v87
    %145 = vmatpush1.msra.mxu0 %v86
    %146 = vmatprep.subr.mxu0 %v85
    %147 = vmatpush1.msra.mxu0 %v84
    %148 = vmatprep.subr.mxu0 %v83
    %149 = vmatpush1.msra.mxu0 %v82
    %150 = vmatprep.subr.mxu0 %v81
    %151 = vmatpush1.msra.mxu0 %v80
    %152 = vmatprep.subr.mxu0 %v79
    %153 = vmatpush1.msra.mxu0 %v78
    %154 = vmatprep.subr.mxu0 0.0
    %155 = vmatpush2.msra.mxu0 0.0
    %156 = vmatprep.subr.mxu0 0.0
    %157 = vmatpush2.msra.mxu0 0.0
    %158 = vmatprep.subr.mxu0 0.0
    %159 = vmatpush2.msra.mxu0 0.0
    %160 = vmatprep.subr.mxu0 0.0
    %161 = vmatpush2.msra.mxu0 0.0
    %162 = vmatprep.subr.mxu0 0.0
    %163 = vmatpush2.msra.mxu0 0.0
    %164 = vmatprep.subr.mxu0 0.0
    %165 = vmatpush2.msra.mxu0 0.0
    %166 = vmatprep.subr.mxu0 0.0
    %167 = vmatpush2.msra.mxu0 0.0
    %168 = vmatprep.subr.mxu0 0.0
    %169 = vmatpush2.msra.mxu0 0.0
    %170 = vmatprep.subr.mxu0 0.0
    %171 = vmatpush2.msra.mxu0 0.0
    %172 = vmatprep.subr.mxu0 0.0
    %173 = vmatpush2.msra.mxu0 0.0
    %174 = vmatprep.subr.mxu0 0.0
    %175 = vmatpush2.msra.mxu0 0.0
    %176 = vmatprep.subr.mxu0 0.0
    %177 = vmatpush2.msra.mxu0 0.0
    %178 = vmatprep.subr.mxu0 0.0
    %179 = vmatpush2.msra.mxu0 0.0
    %180 = vmatprep.subr.mxu0 0.0
    %181 = vmatpush2.msra.mxu0 0.0
    %182 = vmatprep.subr.mxu0 0.0
    %183 = vmatpush2.msra.mxu0 0.0
    %184 = vmatprep.subr.mxu0 0.0
    %185 = vmatpush2.msra.mxu0 0.0
    %186 = vmatprep.mubr.f32.mxu0 0.0
    %187 = vmatmul.mubr.f32.gmra.mxu0 %v70
    %v188 = vpop.f32.mrf.mxu0
    %v189 = vadd.f32 %v115, %v188
    %v190 = vpop.f32.mrf.mxu0
    %v191 = vadd.f32 %v119, %v190
    %192 = vmatprep.mubr.f32.mxu0 0.0
    %193 = vmatmul.mubr.f32.gmra.mxu0 %v71
    %v194 = vpop.f32.mrf.mxu0
    %v195 = vadd.f32 %v115, %v194
    %v196 = vpop.f32.mrf.mxu0
    %v197 = vadd.f32 %v119, %v196
    %198 = vmatprep.mubr.f32.mxu0 0.0
    %199 = vmatmul.mubr.f32.gmra.mxu0 %v72
    %v200 = vpop.f32.mrf.mxu0
    %v201 = vadd.f32 %v115, %v200
    %v202 = vpop.f32.mrf.mxu0
    %v203 = vadd.f32 %v119, %v202
    %204 = vmatprep.mubr.f32.mxu0 0.0
    %205 = vmatmul.mubr.f32.gmra.mxu0 %v73
    %v206 = vpop.f32.mrf.mxu0
    %v207 = vadd.f32 %v115, %v206
    %v208 = vpop.f32.mrf.mxu0
    %v209 = vadd.f32 %v119, %v208
    %210 = vmatprep.mubr.f32.mxu0 0.0
    %211 = vmatmul.mubr.f32.gmra.mxu0 %v74
    %v212 = vpop.f32.mrf.mxu0
    %v213 = vadd.f32 %v115, %v212
    %v214 = vpop.f32.mrf.mxu0
    %v215 = vadd.f32 %v119, %v214
    %216 = vmatprep.mubr.f32.mxu0 0.0
    %217 = vmatmul.mubr.f32.gmra.mxu0 %v75
    %v218 = vpop.f32.mrf.mxu0
    %v219 = vadd.f32 %v115, %v218
    %v220 = vpop.f32.mrf.mxu0
    %v221 = vadd.f32 %v119, %v220
    %222 = vmatprep.mubr.f32.mxu0 0.0
    %223 = vmatmul.mubr.f32.gmra.mxu0 %v76
    %v224 = vpop.f32.mrf.mxu0
    %v225 = vadd.f32 %v115, %v224
    %v226 = vpop.f32.mrf.mxu0
    %v227 = vadd.f32 %v119, %v226
    %228 = vmatprep.mubr.f32.mxu0 0.0
    %229 = vmatmul.mubr.f32.gmra.mxu0 %v77
    %v230 = vpop.f32.mrf.mxu0
    %v231 = vadd.f32 %v115, %v230
    %v232 = vpop.f32.mrf.mxu0
    %v233 = vadd.f32 %v119, %v232
    %234 = vdwg.mxu0
    %235 = vst [vmem:[#allocation2] sm:$0xff] %v189
    %236 = vst [vmem:[#allocation2 + $0x8] sm:$0xff] %v191
    %237 = vst [vmem:[#allocation2 + $0x10] sm:$0xff] %v195
    %238 = vst [vmem:[#allocation2 + $0x18] sm:$0xff] %v197
    %239 = vst [vmem:[#allocation2 + $0x20] sm:$0xff] %v201
    %240 = vst [vmem:[#allocation2 + $0x28] sm:$0xff] %v203
    %241 = vst [vmem:[#allocation2 + $0x30] sm:$0xff] %v207
    %242 = vst [vmem:[#allocation2 + $0x38] sm:$0xff] %v209
    %243 = vst [vmem:[#allocation2 + $0x40] sm:$0xff] %v213
    %244 = vst [vmem:[#allocation2 + $0x48] sm:$0xff] %v215
    %245 = vst [vmem:[#allocation2 + $0x50] sm:$0xff] %v219
    %246 = vst [vmem:[#allocation2 + $0x58] sm:$0xff] %v221
    %247 = vst [vmem:[#allocation2 + $0x60] sm:$0xff] %v225
    %248 = vst [vmem:[#allocation2 + $0x68] sm:$0xff] %v227
    %249 = vst [vmem:[#allocation2 + $0x70] sm:$0xff] %v231
    %250 = vst [vmem:[#allocation2 + $0x78] sm:$0xff] %v233
    %v251 = vld [vmem:[%s5] sm:$0x3]
    %v253 = vlaneseq
    %v254 = vshrl.u32 %v253, 7
    %v255 = vsub.s32 0, %v254
    %v256 = vrot.slane %v251, %v255
    %v257 = vlaneseq
    %v258 = vshrl.u32 %v257, 7
    %v259 = vsub.s32 1, %v258
    %v260 = vrot.slane %v251, %v259
    %s263 = smul.u32 0, 2
    %s264 = smul.addr %s263, 8
    %s265 = scalar_lea.vmem [#allocation2], %s264
    %v266 = vld [vmem:[%s265] sm:$0xff]
    %v267 = vld [vmem:[%s265 + $0x8] sm:$0xff]
    %v268 = vld [vmem:[#allocation5] sm:$0xff]
    %v269 = vld [vmem:[#allocation5 + $0x8] sm:$0xff]
    %v270 = vld [vmem:[#allocation5 + $0x10] sm:$0xff]
    %v271 = vld [vmem:[#allocation5 + $0x18] sm:$0xff]
    %v272 = vld [vmem:[#allocation5 + $0x20] sm:$0xff]
    %v273 = vld [vmem:[#allocation5 + $0x28] sm:$0xff]
    %v274 = vld [vmem:[#allocation5 + $0x30] sm:$0xff]
    %v275 = vld [vmem:[#allocation5 + $0x38] sm:$0xff]
    %v276 = vld [vmem:[#allocation5 + $0x40] sm:$0xff]
    %v277 = vld [vmem:[#allocation5 + $0x48] sm:$0xff]
    %v278 = vld [vmem:[#allocation5 + $0x50] sm:$0xff]
    %v279 = vld [vmem:[#allocation5 + $0x58] sm:$0xff]
    %v280 = vld [vmem:[#allocation5 + $0x60] sm:$0xff]
    %v281 = vld [vmem:[#allocation5 + $0x68] sm:$0xff]
    %v282 = vld [vmem:[#allocation5 + $0x70] sm:$0xff]
    %v283 = vld [vmem:[#allocation5 + $0x78] sm:$0xff]
    %vm284 = vcmask 523264
    %v286 = vsel %vm284, 0.0, 0
    %288 = vmatprep.subr.mxu0 0.0
    %289 = vmatpush1.msra.mxu0 0.0
    %290 = vmatprep.subr.mxu0 0.0
    %291 = vmatpush1.msra.mxu0 0.0
    %292 = vmatprep.subr.mxu0 0.0
    %293 = vmatpush1.msra.mxu0 0.0
    %294 = vmatprep.subr.mxu0 0.0
    %295 = vmatpush1.msra.mxu0 0.0
    %296 = vmatprep.subr.mxu0 0.0
    %297 = vmatpush1.msra.mxu0 0.0
    %298 = vmatprep.subr.mxu0 0.0
    %299 = vmatpush1.msra.mxu0 0.0
    %300 = vmatprep.subr.mxu0 0.0
    %301 = vmatpush1.msra.mxu0 0.0
    %302 = vmatprep.subr.mxu0 0.0
    %303 = vmatpush1.msra.mxu0 0.0
    %304 = vmatprep.subr.mxu0 %v283
    %305 = vmatpush1.msra.mxu0 %v282
    %306 = vmatprep.subr.mxu0 %v281
    %307 = vmatpush1.msra.mxu0 %v280
    %308 = vmatprep.subr.mxu0 %v279
    %309 = vmatpush1.msra.mxu0 %v278
    %310 = vmatprep.subr.mxu0 %v277
    %311 = vmatpush1.msra.mxu0 %v276
    %312 = vmatprep.subr.mxu0 %v275
    %313 = vmatpush1.msra.mxu0 %v274
    %314 = vmatprep.subr.mxu0 %v273
    %315 = vmatpush1.msra.mxu0 %v272
    %316 = vmatprep.subr.mxu0 %v271
    %317 = vmatpush1.msra.mxu0 %v270
    %318 = vmatprep.subr.mxu0 %v269
    %319 = vmatpush1.msra.mxu0 %v268
    %320 = vmatprep.subr.mxu0 0.0
    %321 = vmatpush2.msra.mxu0 0.0
    %322 = vmatprep.subr.mxu0 0.0
    %323 = vmatpush2.msra.mxu0 0.0
    %324 = vmatprep.subr.mxu0 0.0
    %325 = vmatpush2.msra.mxu0 0.0
    %326 = vmatprep.subr.mxu0 0.0
    %327 = vmatpush2.msra.mxu0 0.0
    %328 = vmatprep.subr.mxu0 0.0
    %329 = vmatpush2.msra.mxu0 0.0
    %330 = vmatprep.subr.mxu0 0.0
    %331 = vmatpush2.msra.mxu0 0.0
    %332 = vmatprep.subr.mxu0 0.0
    %333 = vmatpush2.msra.mxu0 0.0
    %334 = vmatprep.subr.mxu0 0.0
    %335 = vmatpush2.msra.mxu0 0.0
    %336 = vmatprep.subr.mxu0 0.0
    %337 = vmatpush2.msra.mxu0 0.0
    %338 = vmatprep.subr.mxu0 0.0
    %339 = vmatpush2.msra.mxu0 0.0
    %340 = vmatprep.subr.mxu0 0.0
    %341 = vmatpush2.msra.mxu0 0.0
    %342 = vmatprep.subr.mxu0 0.0
    %343 = vmatpush2.msra.mxu0 0.0
    %344 = vmatprep.subr.mxu0 0.0
    %345 = vmatpush2.msra.mxu0 0.0
    %346 = vmatprep.subr.mxu0 0.0
    %347 = vmatpush2.msra.mxu0 0.0
    %348 = vmatprep.subr.mxu0 0.0
    %349 = vmatpush2.msra.mxu0 0.0
    %350 = vmatprep.subr.mxu0 0.0
    %351 = vmatpush2.msra.mxu0 0.0
    %352 = vmatprep.mubr.f32.mxu0 0.0
    %353 = vmatmul.mubr.f32.gmra.mxu0 %v286
    %v354 = vpop.f32.mrf.mxu0
    %v355 = vadd.f32 0.0, %v354
    %v356 = vpop.f32.mrf.mxu0
    %v357 = vadd.f32 0.0, %v356
    %358 = vdwg.mxu0
    %v359 = vadd.f32 %v266, %v355
    %v360 = vadd.f32 %v267, %v357
    %v361 = vmul.f32 %v359, 0.5
    %v362 = vtanh.pop %v361
    %v363 = vmul.f32 %v362, 0.5
    %v364 = vadd.f32 %v363, 0.5
    %v365 = vtanh.pop %v360
    %v366 = vmul.f32 %v360, 0.5
    %v367 = vtanh.pop %v366
    %v368 = vmul.f32 %v367, 0.5
    %v369 = vadd.f32 %v368, 0.5
    %v370 = vmul.f32 %v364, 0.0
    %v371 = vmul.f32 %v364, %v365
    %373 = vrot.lane.b32.xlu0 %v371, 64
    %v374 = vpop.permute.xlu0 %373
    %v376 = vadd.f32 %v370, %v374
    %v377 = vtanh.pop %v376
    %v378 = vmul.f32 %v369, %v377
    %380 = vrot.lane.b32.xlu0 %v378, 64
    %v381 = vpop.permute.xlu0 %380
    %v383 = vsel %vm284, %v381, 0.0
    %v384 = vld [vmem:[#allocation7] sm:$0xff]
    %v385 = vld [vmem:[#allocation7 + $0x8] sm:$0xff]
    %v386 = vld [vmem:[#allocation7 + $0x10] sm:$0xff]
    %v387 = vld [vmem:[#allocation7 + $0x18] sm:$0xff]
    %v388 = vld [vmem:[#allocation7 + $0x20] sm:$0xff]
    %v389 = vld [vmem:[#allocation7 + $0x28] sm:$0xff]
    %v390 = vld [vmem:[#allocation7 + $0x30] sm:$0xff]
    %v391 = vld [vmem:[#allocation7 + $0x38] sm:$0xff]
    %v392 = vld [vmem:[#allocation7 + $0x40] sm:$0xff]
    %v393 = vld [vmem:[#allocation7 + $0x48] sm:$0xff]
    %v394 = vld [vmem:[#allocation7 + $0x50] sm:$0xff]
    %v395 = vld [vmem:[#allocation7 + $0x58] sm:$0xff]
    %v396 = vld [vmem:[#allocation7 + $0x60] sm:$0xff]
    %v397 = vld [vmem:[#allocation7 + $0x68] sm:$0xff]
    %v398 = vld [vmem:[#allocation7 + $0x70] sm:$0xff]
    %v399 = vld [vmem:[#allocation7 + $0x78] sm:$0xff]
    %v400 = vld [vmem:[#allocation7 + $0x80] sm:$0xff]
    %v401 = vld [vmem:[#allocation7 + $0x88] sm:$0xff]
    %v402 = vld [vmem:[#allocation7 + $0x90] sm:$0xff]
    %v403 = vld [vmem:[#allocation7 + $0x98] sm:$0xff]
    %v404 = vld [vmem:[#allocation7 + $0xa0] sm:$0xff]
    %v405 = vld [vmem:[#allocation7 + $0xa8] sm:$0xff]
    %v406 = vld [vmem:[#allocation7 + $0xb0] sm:$0xff]
    %v407 = vld [vmem:[#allocation7 + $0xb8] sm:$0xff]
    %v408 = vld [vmem:[#allocation7 + $0xc0] sm:$0xff]
    %v409 = vld [vmem:[#allocation7 + $0xc8] sm:$0xff]
    %v410 = vld [vmem:[#allocation7 + $0xd0] sm:$0xff]
    %v411 = vld [vmem:[#allocation7 + $0xd8] sm:$0xff]
    %v412 = vld [vmem:[#allocation7 + $0xe0] sm:$0xff]
    %v413 = vld [vmem:[#allocation7 + $0xe8] sm:$0xff]
    %v414 = vld [vmem:[#allocation7 + $0xf0] sm:$0xff]
    %v415 = vld [vmem:[#allocation7 + $0xf8] sm:$0xff]
    %416 = vmatprep.subr.mxu0 %v415
    %417 = vmatpush1.msra.mxu0 %v414
    %418 = vmatprep.subr.mxu0 %v413
    %419 = vmatpush1.msra.mxu0 %v412
    %420 = vmatprep.subr.mxu0 %v411
    %421 = vmatpush1.msra.mxu0 %v410
    %422 = vmatprep.subr.mxu0 %v409
    %423 = vmatpush1.msra.mxu0 %v408
    %424 = vmatprep.subr.mxu0 %v407
    %425 = vmatpush1.msra.mxu0 %v406
    %426 = vmatprep.subr.mxu0 %v405
    %427 = vmatpush1.msra.mxu0 %v404
    %428 = vmatprep.subr.mxu0 %v403
    %429 = vmatpush1.msra.mxu0 %v402
    %430 = vmatprep.subr.mxu0 %v401
    %431 = vmatpush1.msra.mxu0 %v400
    %432 = vmatprep.subr.mxu0 %v399
    %433 = vmatpush1.msra.mxu0 %v398
    %434 = vmatprep.subr.mxu0 %v397
    %435 = vmatpush1.msra.mxu0 %v396
    %436 = vmatprep.subr.mxu0 %v395
    %437 = vmatpush1.msra.mxu0 %v394
    %438 = vmatprep.subr.mxu0 %v393
    %439 = vmatpush1.msra.mxu0 %v392
    %440 = vmatprep.subr.mxu0 %v391
    %441 = vmatpush1.msra.mxu0 %v390
    %442 = vmatprep.subr.mxu0 %v389
    %443 = vmatpush1.msra.mxu0 %v388
    %444 = vmatprep.subr.mxu0 %v387
    %445 = vmatpush1.msra.mxu0 %v386
    %446 = vmatprep.subr.mxu0 %v385
    %447 = vmatpush1.msra.mxu0 %v384
    %448 = vmatprep.subr.mxu0 0.0
    %449 = vmatpush2.msra.mxu0 0.0
    %450 = vmatprep.subr.mxu0 0.0
    %451 = vmatpush2.msra.mxu0 0.0
    %452 = vmatprep.subr.mxu0 0.0
    %453 = vmatpush2.msra.mxu0 0.0
    %454 = vmatprep.subr.mxu0 0.0
    %455 = vmatpush2.msra.mxu0 0.0
    %456 = vmatprep.subr.mxu0 0.0
    %457 = vmatpush2.msra.mxu0 0.0
    %458 = vmatprep.subr.mxu0 0.0
    %459 = vmatpush2.msra.mxu0 0.0
    %460 = vmatprep.subr.mxu0 0.0
    %461 = vmatpush2.msra.mxu0 0.0
    %462 = vmatprep.subr.mxu0 0.0
    %463 = vmatpush2.msra.mxu0 0.0
    %464 = vmatprep.subr.mxu0 0.0
    %465 = vmatpush2.msra.mxu0 0.0
    %466 = vmatprep.subr.mxu0 0.0
    %467 = vmatpush2.msra.mxu0 0.0
    %468 = vmatprep.subr.mxu0 0.0
    %469 = vmatpush2.msra.mxu0 0.0
    %470 = vmatprep.subr.mxu0 0.0
    %471 = vmatpush2.msra.mxu0 0.0
    %472 = vmatprep.subr.mxu0 0.0
    %473 = vmatpush2.msra.mxu0 0.0
    %474 = vmatprep.subr.mxu0 0.0
    %475 = vmatpush2.msra.mxu0 0.0
    %476 = vmatprep.subr.mxu0 0.0
    %477 = vmatpush2.msra.mxu0 0.0
    %478 = vmatprep.subr.mxu0 0.0
    %479 = vmatpush2.msra.mxu0 0.0
    %480 = vmatprep.mubr.f32.mxu0 0.0
    %481 = vmatmul.mubr.f32.gmra.mxu0 %v383
    %v482 = vpop.f32.mrf.mxu0
    %v483 = vadd.f32 %v256, %v482
    %v484 = vpop.f32.mrf.mxu0
    %v485 = vadd.f32 %v260, %v484
    %486 = vdwg.mxu0
    %v487 = vmul.f32 %v483, 0.5
    %v488 = vtanh.pop %v487
    %v489 = vmul.f32 %v488, 0.5
    %v490 = vadd.f32 %v489, 0.5
    %v491 = vtanh.pop %v485
    %v492 = vmul.f32 %v485, 0.5
    %v493 = vtanh.pop %v492
    %v494 = vmul.f32 %v493, 0.5
    %v495 = vadd.f32 %v494, 0.5
    %v496 = vmul.f32 %v490, 0.0
    %v497 = vmul.f32 %v490, %v491
    %499 = vrot.lane.b32.xlu0 %v497, 64
    %v500 = vpop.permute.xlu0 %499
    %v502 = vadd.f32 %v496, %v500
    %v503 = vtanh.pop %v502
    %v504 = vmul.f32 %v495, %v503
    %s505 = smul.u32 1, 2
    %s506 = smul.addr %s505, 8
    %s507 = scalar_lea.vmem [#allocation2], %s506
    %v508 = vld [vmem:[%s507] sm:$0xff]
    %v509 = vld [vmem:[%s507 + $0x8] sm:$0xff]
    %v510 = vsel %vm284, %v381, 0
    %512 = vmatprep.subr.mxu0 0.0
    %513 = vmatpush1.msra.mxu0 0.0
    %514 = vmatprep.subr.mxu0 0.0
    %515 = vmatpush1.msra.mxu0 0.0
    %516 = vmatprep.subr.mxu0 0.0
    %517 = vmatpush1.msra.mxu0 0.0
    %518 = vmatprep.subr.mxu0 0.0
    %519 = vmatpush1.msra.mxu0 0.0
    %520 = vmatprep.subr.mxu0 0.0
    %521 = vmatpush1.msra.mxu0 0.0
    %522 = vmatprep.subr.mxu0 0.0
    %523 = vmatpush1.msra.mxu0 0.0
    %524 = vmatprep.subr.mxu0 0.0
    %525 = vmatpush1.msra.mxu0 0.0
    %526 = vmatprep.subr.mxu0 0.0
    %527 = vmatpush1.msra.mxu0 0.0
    %528 = vmatprep.subr.mxu0 %v283
    %529 = vmatpush1.msra.mxu0 %v282
    %530 = vmatprep.subr.mxu0 %v281
    %531 = vmatpush1.msra.mxu0 %v280
    %532 = vmatprep.subr.mxu0 %v279
    %533 = vmatpush1.msra.mxu0 %v278
    %534 = vmatprep.subr.mxu0 %v277
    %535 = vmatpush1.msra.mxu0 %v276
    %536 = vmatprep.subr.mxu0 %v275
    %537 = vmatpush1.msra.mxu0 %v274
    %538 = vmatprep.subr.mxu0 %v273
    %539 = vmatpush1.msra.mxu0 %v272
    %540 = vmatprep.subr.mxu0 %v271
    %541 = vmatpush1.msra.mxu0 %v270
    %542 = vmatprep.subr.mxu0 %v269
    %543 = vmatpush1.msra.mxu0 %v268
    %544 = vmatprep.subr.mxu0 0.0
    %545 = vmatpush2.msra.mxu0 0.0
    %546 = vmatprep.subr.mxu0 0.0
    %547 = vmatpush2.msra.mxu0 0.0
    %548 = vmatprep.subr.mxu0 0.0
    %549 = vmatpush2.msra.mxu0 0.0
    %550 = vmatprep.subr.mxu0 0.0
    %551 = vmatpush2.msra.mxu0 0.0
    %552 = vmatprep.subr.mxu0 0.0
    %553 = vmatpush2.msra.mxu0 0.0
    %554 = vmatprep.subr.mxu0 0.0
    %555 = vmatpush2.msra.mxu0 0.0
    %556 = vmatprep.subr.mxu0 0.0
    %557 = vmatpush2.msra.mxu0 0.0
    %558 = vmatprep.subr.mxu0 0.0
    %559 = vmatpush2.msra.mxu0 0.0
    %560 = vmatprep.subr.mxu0 0.0
    %561 = vmatpush2.msra.mxu0 0.0
    %562 = vmatprep.subr.mxu0 0.0
    %563 = vmatpush2.msra.mxu0 0.0
    %564 = vmatprep.subr.mxu0 0.0
    %565 = vmatpush2.msra.mxu0 0.0
    %566 = vmatprep.subr.mxu0 0.0
    %567 = vmatpush2.msra.mxu0 0.0
    %568 = vmatprep.subr.mxu0 0.0
    %569 = vmatpush2.msra.mxu0 0.0
    %570 = vmatprep.subr.mxu0 0.0
    %571 = vmatpush2.msra.mxu0 0.0
    %572 = vmatprep.subr.mxu0 0.0
    %573 = vmatpush2.msra.mxu0 0.0
    %574 = vmatprep.subr.mxu0 0.0
    %575 = vmatpush2.msra.mxu0 0.0
    %576 = vmatprep.mubr.f32.mxu0 0.0
    %577 = vmatmul.mubr.f32.gmra.mxu0 %v510
    %v578 = vpop.f32.mrf.mxu0
    %v579 = vadd.f32 0.0, %v578
    %v580 = vpop.f32.mrf.mxu0
    %v581 = vadd.f32 0.0, %v580
    %582 = vdwg.mxu0
    %v583 = vadd.f32 %v508, %v579
    %v584 = vadd.f32 %v509, %v581
    %v585 = vmul.f32 %v583, 0.5
    %v586 = vtanh.pop %v585
    %v587 = vmul.f32 %v586, 0.5
    %v588 = vadd.f32 %v587, 0.5
    %v589 = vtanh.pop %v584
    %v590 = vmul.f32 %v584, 0.5
    %v591 = vtanh.pop %v590
    %v592 = vmul.f32 %v591, 0.5
    %v593 = vadd.f32 %v592, 0.5
    %v594 = vmul.f32 %v588, %v376
    %v595 = vmul.f32 %v588, %v589
    %597 = vrot.lane.b32.xlu0 %v595, 64
    %v598 = vpop.permute.xlu0 %597
    %v600 = vadd.f32 %v594, %v598
    %v601 = vtanh.pop %v600
    %v602 = vmul.f32 %v593, %v601
    %604 = vrot.lane.b32.xlu0 %v602, 64
    %v605 = vpop.permute.xlu0 %604
    %v607 = vsel %vm284, %v605, %v504
    %608 = vmatprep.subr.mxu0 %v415
    %609 = vmatpush1.msra.mxu0 %v414
    %610 = vmatprep.subr.mxu0 %v413
    %611 = vmatpush1.msra.mxu0 %v412
    %612 = vmatprep.subr.mxu0 %v411
    %613 = vmatpush1.msra.mxu0 %v410
    %614 = vmatprep.subr.mxu0 %v409
    %615 = vmatpush1.msra.mxu0 %v408
    %616 = vmatprep.subr.mxu0 %v407
    %617 = vmatpush1.msra.mxu0 %v406
    %618 = vmatprep.subr.mxu0 %v405
    %619 = vmatpush1.msra.mxu0 %v404
    %620 = vmatprep.subr.mxu0 %v403
    %621 = vmatpush1.msra.mxu0 %v402
    %622 = vmatprep.subr.mxu0 %v401
    %623 = vmatpush1.msra.mxu0 %v400
    %624 = vmatprep.subr.mxu0 %v399
    %625 = vmatpush1.msra.mxu0 %v398
    %626 = vmatprep.subr.mxu0 %v397
    %627 = vmatpush1.msra.mxu0 %v396
    %628 = vmatprep.subr.mxu0 %v395
    %629 = vmatpush1.msra.mxu0 %v394
    %630 = vmatprep.subr.mxu0 %v393
    %631 = vmatpush1.msra.mxu0 %v392
    %632 = vmatprep.subr.mxu0 %v391
    %633 = vmatpush1.msra.mxu0 %v390
    %634 = vmatprep.subr.mxu0 %v389
    %635 = vmatpush1.msra.mxu0 %v388
    %636 = vmatprep.subr.mxu0 %v387
    %637 = vmatpush1.msra.mxu0 %v386
    %638 = vmatprep.subr.mxu0 %v385
    %639 = vmatpush1.msra.mxu0 %v384
    %640 = vmatprep.subr.mxu0 0.0
    %641 = vmatpush2.msra.mxu0 0.0
    %642 = vmatprep.subr.mxu0 0.0
    %643 = vmatpush2.msra.mxu0 0.0
    %644 = vmatprep.subr.mxu0 0.0
    %645 = vmatpush2.msra.mxu0 0.0
    %646 = vmatprep.subr.mxu0 0.0
    %647 = vmatpush2.msra.mxu0 0.0
    %648 = vmatprep.subr.mxu0 0.0
    %649 = vmatpush2.msra.mxu0 0.0
    %650 = vmatprep.subr.mxu0 0.0
    %651 = vmatpush2.msra.mxu0 0.0
    %652 = vmatprep.subr.mxu0 0.0
    %653 = vmatpush2.msra.mxu0 0.0
    %654 = vmatprep.subr.mxu0 0.0
    %655 = vmatpush2.msra.mxu0 0.0
    %656 = vmatprep.subr.mxu0 0.0
    %657 = vmatpush2.msra.mxu0 0.0
    %658 = vmatprep.subr.mxu0 0.0
    %659 = vmatpush2.msra.mxu0 0.0
    %660 = vmatprep.subr.mxu0 0.0
    %661 = vmatpush2.msra.mxu0 0.0
    %662 = vmatprep.subr.mxu0 0.0
    %663 = vmatpush2.msra.mxu0 0.0
    %664 = vmatprep.subr.mxu0 0.0
    %665 = vmatpush2.msra.mxu0 0.0
    %666 = vmatprep.subr.mxu0 0.0
    %667 = vmatpush2.msra.mxu0 0.0
    %668 = vmatprep.subr.mxu0 0.0
    %669 = vmatpush2.msra.mxu0 0.0
    %670 = vmatprep.subr.mxu0 0.0
    %671 = vmatpush2.msra.mxu0 0.0
    %672 = vmatprep.mubr.f32.mxu0 0.0
    %673 = vmatmul.mubr.f32.gmra.mxu0 %v607
    %v674 = vpop.f32.mrf.mxu0
    %v675 = vadd.f32 %v256, %v674
    %v676 = vpop.f32.mrf.mxu0
    %v677 = vadd.f32 %v260, %v676
    %678 = vdwg.mxu0
    %v679 = vmul.f32 %v675, 0.5
    %v680 = vtanh.pop %v679
    %v681 = vmul.f32 %v680, 0.5
    %v682 = vadd.f32 %v681, 0.5
    %v683 = vtanh.pop %v677
    %v684 = vmul.f32 %v677, 0.5
    %v685 = vtanh.pop %v684
    %v686 = vmul.f32 %v685, 0.5
    %v687 = vadd.f32 %v686, 0.5
    %v688 = vmul.f32 %v682, %v502
    %v689 = vmul.f32 %v682, %v683
    %691 = vrot.lane.b32.xlu0 %v689, 64
    %v692 = vpop.permute.xlu0 %691
    %v694 = vadd.f32 %v688, %v692
    %v695 = vtanh.pop %v694
    %v696 = vmul.f32 %v687, %v695
    %s697 = smul.u32 2, 2
    %s698 = smul.addr %s697, 8
    %s699 = scalar_lea.vmem [#allocation2], %s698
    %v700 = vld [vmem:[%s699] sm:$0xff]
    %v701 = vld [vmem:[%s699 + $0x8] sm:$0xff]
    %v702 = vsel %vm284, %v605, 0
    %704 = vmatprep.subr.mxu0 0.0
    %705 = vmatpush1.msra.mxu0 0.0
    %706 = vmatprep.subr.mxu0 0.0
    %707 = vmatpush1.msra.mxu0 0.0
    %708 = vmatprep.subr.mxu0 0.0
    %709 = vmatpush1.msra.mxu0 0.0
    %710 = vmatprep.subr.mxu0 0.0
    %711 = vmatpush1.msra.mxu0 0.0
    %712 = vmatprep.subr.mxu0 0.0
    %713 = vmatpush1.msra.mxu0 0.0
    %714 = vmatprep.subr.mxu0 0.0
    %715 = vmatpush1.msra.mxu0 0.0
    %716 = vmatprep.subr.mxu0 0.0
    %717 = vmatpush1.msra.mxu0 0.0
    %718 = vmatprep.subr.mxu0 0.0
    %719 = vmatpush1.msra.mxu0 0.0
    %720 = vmatprep.subr.mxu0 %v283
    %721 = vmatpush1.msra.mxu0 %v282
    %722 = vmatprep.subr.mxu0 %v281
    %723 = vmatpush1.msra.mxu0 %v280
    %724 = vmatprep.subr.mxu0 %v279
    %725 = vmatpush1.msra.mxu0 %v278
    %726 = vmatprep.subr.mxu0 %v277
    %727 = vmatpush1.msra.mxu0 %v276
    %728 = vmatprep.subr.mxu0 %v275
    %729 = vmatpush1.msra.mxu0 %v274
    %730 = vmatprep.subr.mxu0 %v273
    %731 = vmatpush1.msra.mxu0 %v272
    %732 = vmatprep.subr.mxu0 %v271
    %733 = vmatpush1.msra.mxu0 %v270
    %734 = vmatprep.subr.mxu0 %v269
    %735 = vmatpush1.msra.mxu0 %v268
    %736 = vmatprep.subr.mxu0 0.0
    %737 = vmatpush2.msra.mxu0 0.0
    %738 = vmatprep.subr.mxu0 0.0
    %739 = vmatpush2.msra.mxu0 0.0
    %740 = vmatprep.subr.mxu0 0.0
    %741 = vmatpush2.msra.mxu0 0.0
    %742 = vmatprep.subr.mxu0 0.0
    %743 = vmatpush2.msra.mxu0 0.0
    %744 = vmatprep.subr.mxu0 0.0
    %745 = vmatpush2.msra.mxu0 0.0
    %746 = vmatprep.subr.mxu0 0.0
    %747 = vmatpush2.msra.mxu0 0.0
    %748 = vmatprep.subr.mxu0 0.0
    %749 = vmatpush2.msra.mxu0 0.0
    %750 = vmatprep.subr.mxu0 0.0
    %751 = vmatpush2.msra.mxu0 0.0
    %752 = vmatprep.subr.mxu0 0.0
    %753 = vmatpush2.msra.mxu0 0.0
    %754 = vmatprep.subr.mxu0 0.0
    %755 = vmatpush2.msra.mxu0 0.0
    %756 = vmatprep.subr.mxu0 0.0
    %757 = vmatpush2.msra.mxu0 0.0
    %758 = vmatprep.subr.mxu0 0.0
    %759 = vmatpush2.msra.mxu0 0.0
    %760 = vmatprep.subr.mxu0 0.0
    %761 = vmatpush2.msra.mxu0 0.0
    %762 = vmatprep.subr.mxu0 0.0
    %763 = vmatpush2.msra.mxu0 0.0
    %764 = vmatprep.subr.mxu0 0.0
    %765 = vmatpush2.msra.mxu0 0.0
    %766 = vmatprep.subr.mxu0 0.0
    %767 = vmatpush2.msra.mxu0 0.0
    %768 = vmatprep.mubr.f32.mxu0 0.0
    %769 = vmatmul.mubr.f32.gmra.mxu0 %v702
    %v770 = vpop.f32.mrf.mxu0
    %v771 = vadd.f32 0.0, %v770
    %v772 = vpop.f32.mrf.mxu0
    %v773 = vadd.f32 0.0, %v772
    %774 = vdwg.mxu0
    %v775 = vadd.f32 %v700, %v771
    %v776 = vadd.f32 %v701, %v773
    %v777 = vmul.f32 %v775, 0.5
    %v778 = vtanh.pop %v777
    %v779 = vmul.f32 %v778, 0.5
    %v780 = vadd.f32 %v779, 0.5
    %v781 = vtanh.pop %v776
    %v782 = vmul.f32 %v776, 0.5
    %v783 = vtanh.pop %v782
    %v784 = vmul.f32 %v783, 0.5
    %v785 = vadd.f32 %v784, 0.5
    %v786 = vmul.f32 %v780, %v600
    %v787 = vmul.f32 %v780, %v781
    %789 = vrot.lane.b32.xlu0 %v787, 64
    %v790 = vpop.permute.xlu0 %789
    %v792 = vadd.f32 %v786, %v790
    %v793 = vtanh.pop %v792
    %v794 = vmul.f32 %v785, %v793
    %796 = vrot.lane.b32.xlu0 %v794, 64
    %v797 = vpop.permute.xlu0 %796
    %v799 = vsel %vm284, %v797, %v696
    %800 = vmatprep.subr.mxu0 %v415
    %801 = vmatpush1.msra.mxu0 %v414
    %802 = vmatprep.subr.mxu0 %v413
    %803 = vmatpush1.msra.mxu0 %v412
    %804 = vmatprep.subr.mxu0 %v411
    %805 = vmatpush1.msra.mxu0 %v410
    %806 = vmatprep.subr.mxu0 %v409
    %807 = vmatpush1.msra.mxu0 %v408
    %808 = vmatprep.subr.mxu0 %v407
    %809 = vmatpush1.msra.mxu0 %v406
    %810 = vmatprep.subr.mxu0 %v405
    %811 = vmatpush1.msra.mxu0 %v404
    %812 = vmatprep.subr.mxu0 %v403
    %813 = vmatpush1.msra.mxu0 %v402
    %814 = vmatprep.subr.mxu0 %v401
    %815 = vmatpush1.msra.mxu0 %v400
    %816 = vmatprep.subr.mxu0 %v399
    %817 = vmatpush1.msra.mxu0 %v398
    %818 = vmatprep.subr.mxu0 %v397
    %819 = vmatpush1.msra.mxu0 %v396
    %820 = vmatprep.subr.mxu0 %v395
    %821 = vmatpush1.msra.mxu0 %v394
    %822 = vmatprep.subr.mxu0 %v393
    %823 = vmatpush1.msra.mxu0 %v392
    %824 = vmatprep.subr.mxu0 %v391
    %825 = vmatpush1.msra.mxu0 %v390
    %826 = vmatprep.subr.mxu0 %v389
    %827 = vmatpush1.msra.mxu0 %v388
    %828 = vmatprep.subr.mxu0 %v387
    %829 = vmatpush1.msra.mxu0 %v386
    %830 = vmatprep.subr.mxu0 %v385
    %831 = vmatpush1.msra.mxu0 %v384
    %832 = vmatprep.subr.mxu0 0.0
    %833 = vmatpush2.msra.mxu0 0.0
    %834 = vmatprep.subr.mxu0 0.0
    %835 = vmatpush2.msra.mxu0 0.0
    %836 = vmatprep.subr.mxu0 0.0
    %837 = vmatpush2.msra.mxu0 0.0
    %838 = vmatprep.subr.mxu0 0.0
    %839 = vmatpush2.msra.mxu0 0.0
    %840 = vmatprep.subr.mxu0 0.0
    %841 = vmatpush2.msra.mxu0 0.0
    %842 = vmatprep.subr.mxu0 0.0
    %843 = vmatpush2.msra.mxu0 0.0
    %844 = vmatprep.subr.mxu0 0.0
    %845 = vmatpush2.msra.mxu0 0.0
    %846 = vmatprep.subr.mxu0 0.0
    %847 = vmatpush2.msra.mxu0 0.0
    %848 = vmatprep.subr.mxu0 0.0
    %849 = vmatpush2.msra.mxu0 0.0
    %850 = vmatprep.subr.mxu0 0.0
    %851 = vmatpush2.msra.mxu0 0.0
    %852 = vmatprep.subr.mxu0 0.0
    %853 = vmatpush2.msra.mxu0 0.0
    %854 = vmatprep.subr.mxu0 0.0
    %855 = vmatpush2.msra.mxu0 0.0
    %856 = vmatprep.subr.mxu0 0.0
    %857 = vmatpush2.msra.mxu0 0.0
    %858 = vmatprep.subr.mxu0 0.0
    %859 = vmatpush2.msra.mxu0 0.0
    %860 = vmatprep.subr.mxu0 0.0
    %861 = vmatpush2.msra.mxu0 0.0
    %862 = vmatprep.subr.mxu0 0.0
    %863 = vmatpush2.msra.mxu0 0.0
    %864 = vmatprep.mubr.f32.mxu0 0.0
    %865 = vmatmul.mubr.f32.gmra.mxu0 %v799
    %v866 = vpop.f32.mrf.mxu0
    %v867 = vadd.f32 %v256, %v866
    %v868 = vpop.f32.mrf.mxu0
    %v869 = vadd.f32 %v260, %v868
    %870 = vdwg.mxu0
    %v871 = vmul.f32 %v867, 0.5
    %v872 = vtanh.pop %v871
    %v873 = vmul.f32 %v872, 0.5
    %v874 = vadd.f32 %v873, 0.5
    %v875 = vtanh.pop %v869
    %v876 = vmul.f32 %v869, 0.5
    %v877 = vtanh.pop %v876
    %v878 = vmul.f32 %v877, 0.5
    %v879 = vadd.f32 %v878, 0.5
    %v880 = vmul.f32 %v874, %v694
    %v881 = vmul.f32 %v874, %v875
    %883 = vrot.lane.b32.xlu0 %v881, 64
    %v884 = vpop.permute.xlu0 %883
    %v886 = vadd.f32 %v880, %v884
    %v887 = vtanh.pop %v886
    %v888 = vmul.f32 %v879, %v887
    %s889 = smul.u32 3, 2
    %s890 = smul.addr %s889, 8
    %s891 = scalar_lea.vmem [#allocation2], %s890
    %v892 = vld [vmem:[%s891] sm:$0xff]
    %v893 = vld [vmem:[%s891 + $0x8] sm:$0xff]
    %v894 = vsel %vm284, %v797, 0
    %896 = vmatprep.subr.mxu0 0.0
    %897 = vmatpush1.msra.mxu0 0.0
    %898 = vmatprep.subr.mxu0 0.0
    %899 = vmatpush1.msra.mxu0 0.0
    %900 = vmatprep.subr.mxu0 0.0
    %901 = vmatpush1.msra.mxu0 0.0
    %902 = vmatprep.subr.mxu0 0.0
    %903 = vmatpush1.msra.mxu0 0.0
    %904 = vmatprep.subr.mxu0 0.0
    %905 = vmatpush1.msra.mxu0 0.0
    %906 = vmatprep.subr.mxu0 0.0
    %907 = vmatpush1.msra.mxu0 0.0
    %908 = vmatprep.subr.mxu0 0.0
    %909 = vmatpush1.msra.mxu0 0.0
    %910 = vmatprep.subr.mxu0 0.0
    %911 = vmatpush1.msra.mxu0 0.0
    %912 = vmatprep.subr.mxu0 %v283
    %913 = vmatpush1.msra.mxu0 %v282
    %914 = vmatprep.subr.mxu0 %v281
    %915 = vmatpush1.msra.mxu0 %v280
    %916 = vmatprep.subr.mxu0 %v279
    %917 = vmatpush1.msra.mxu0 %v278
    %918 = vmatprep.subr.mxu0 %v277
    %919 = vmatpush1.msra.mxu0 %v276
    %920 = vmatprep.subr.mxu0 %v275
    %921 = vmatpush1.msra.mxu0 %v274
    %922 = vmatprep.subr.mxu0 %v273
    %923 = vmatpush1.msra.mxu0 %v272
    %924 = vmatprep.subr.mxu0 %v271
    %925 = vmatpush1.msra.mxu0 %v270
    %926 = vmatprep.subr.mxu0 %v269
    %927 = vmatpush1.msra.mxu0 %v268
    %928 = vmatprep.subr.mxu0 0.0
    %929 = vmatpush2.msra.mxu0 0.0
    %930 = vmatprep.subr.mxu0 0.0
    %931 = vmatpush2.msra.mxu0 0.0
    %932 = vmatprep.subr.mxu0 0.0
    %933 = vmatpush2.msra.mxu0 0.0
    %934 = vmatprep.subr.mxu0 0.0
    %935 = vmatpush2.msra.mxu0 0.0
    %936 = vmatprep.subr.mxu0 0.0
    %937 = vmatpush2.msra.mxu0 0.0
    %938 = vmatprep.subr.mxu0 0.0
    %939 = vmatpush2.msra.mxu0 0.0
    %940 = vmatprep.subr.mxu0 0.0
    %941 = vmatpush2.msra.mxu0 0.0
    %942 = vmatprep.subr.mxu0 0.0
    %943 = vmatpush2.msra.mxu0 0.0
    %944 = vmatprep.subr.mxu0 0.0
    %945 = vmatpush2.msra.mxu0 0.0
    %946 = vmatprep.subr.mxu0 0.0
    %947 = vmatpush2.msra.mxu0 0.0
    %948 = vmatprep.subr.mxu0 0.0
    %949 = vmatpush2.msra.mxu0 0.0
    %950 = vmatprep.subr.mxu0 0.0
    %951 = vmatpush2.msra.mxu0 0.0
    %952 = vmatprep.subr.mxu0 0.0
    %953 = vmatpush2.msra.mxu0 0.0
    %954 = vmatprep.subr.mxu0 0.0
    %955 = vmatpush2.msra.mxu0 0.0
    %956 = vmatprep.subr.mxu0 0.0
    %957 = vmatpush2.msra.mxu0 0.0
    %958 = vmatprep.subr.mxu0 0.0
    %959 = vmatpush2.msra.mxu0 0.0
    %960 = vmatprep.mubr.f32.mxu0 0.0
    %961 = vmatmul.mubr.f32.gmra.mxu0 %v894
    %v962 = vpop.f32.mrf.mxu0
    %v963 = vadd.f32 0.0, %v962
    %v964 = vpop.f32.mrf.mxu0
    %v965 = vadd.f32 0.0, %v964
    %966 = vdwg.mxu0
    %v967 = vadd.f32 %v892, %v963
    %v968 = vadd.f32 %v893, %v965
    %v969 = vmul.f32 %v967, 0.5
    %v970 = vtanh.pop %v969
    %v971 = vmul.f32 %v970, 0.5
    %v972 = vadd.f32 %v971, 0.5
    %v973 = vtanh.pop %v968
    %v974 = vmul.f32 %v968, 0.5
    %v975 = vtanh.pop %v974
    %v976 = vmul.f32 %v975, 0.5
    %v977 = vadd.f32 %v976, 0.5
    %v978 = vmul.f32 %v972, %v792
    %v979 = vmul.f32 %v972, %v973
    %981 = vrot.lane.b32.xlu0 %v979, 64
    %v982 = vpop.permute.xlu0 %981
    %v984 = vadd.f32 %v978, %v982
    %v985 = vtanh.pop %v984
    %v986 = vmul.f32 %v977, %v985
    %988 = vrot.lane.b32.xlu0 %v986, 64
    %v989 = vpop.permute.xlu0 %988
    %v991 = vsel %vm284, %v989, %v888
    %992 = vmatprep.subr.mxu0 %v415
    %993 = vmatpush1.msra.mxu0 %v414
    %994 = vmatprep.subr.mxu0 %v413
    %995 = vmatpush1.msra.mxu0 %v412
    %996 = vmatprep.subr.mxu0 %v411
    %997 = vmatpush1.msra.mxu0 %v410
    %998 = vmatprep.subr.mxu0 %v409
    %999 = vmatpush1.msra.mxu0 %v408
    %1000 = vmatprep.subr.mxu0 %v407
    %1001 = vmatpush1.msra.mxu0 %v406
    %1002 = vmatprep.subr.mxu0 %v405
    %1003 = vmatpush1.msra.mxu0 %v404
    %1004 = vmatprep.subr.mxu0 %v403
    %1005 = vmatpush1.msra.mxu0 %v402
    %1006 = vmatprep.subr.mxu0 %v401
    %1007 = vmatpush1.msra.mxu0 %v400
    %1008 = vmatprep.subr.mxu0 %v399
    %1009 = vmatpush1.msra.mxu0 %v398
    %1010 = vmatprep.subr.mxu0 %v397
    %1011 = vmatpush1.msra.mxu0 %v396
    %1012 = vmatprep.subr.mxu0 %v395
    %1013 = vmatpush1.msra.mxu0 %v394
    %1014 = vmatprep.subr.mxu0 %v393
    %1015 = vmatpush1.msra.mxu0 %v392
    %1016 = vmatprep.subr.mxu0 %v391
    %1017 = vmatpush1.msra.mxu0 %v390
    %1018 = vmatprep.subr.mxu0 %v389
    %1019 = vmatpush1.msra.mxu0 %v388
    %1020 = vmatprep.subr.mxu0 %v387
    %1021 = vmatpush1.msra.mxu0 %v386
    %1022 = vmatprep.subr.mxu0 %v385
    %1023 = vmatpush1.msra.mxu0 %v384
    %1024 = vmatprep.subr.mxu0 0.0
    %1025 = vmatpush2.msra.mxu0 0.0
    %1026 = vmatprep.subr.mxu0 0.0
    %1027 = vmatpush2.msra.mxu0 0.0
    %1028 = vmatprep.subr.mxu0 0.0
    %1029 = vmatpush2.msra.mxu0 0.0
    %1030 = vmatprep.subr.mxu0 0.0
    %1031 = vmatpush2.msra.mxu0 0.0
    %1032 = vmatprep.subr.mxu0 0.0
    %1033 = vmatpush2.msra.mxu0 0.0
    %1034 = vmatprep.subr.mxu0 0.0
    %1035 = vmatpush2.msra.mxu0 0.0
    %1036 = vmatprep.subr.mxu0 0.0
    %1037 = vmatpush2.msra.mxu0 0.0
    %1038 = vmatprep.subr.mxu0 0.0
    %1039 = vmatpush2.msra.mxu0 0.0
    %1040 = vmatprep.subr.mxu0 0.0
    %1041 = vmatpush2.msra.mxu0 0.0
    %1042 = vmatprep.subr.mxu0 0.0
    %1043 = vmatpush2.msra.mxu0 0.0
    %1044 = vmatprep.subr.mxu0 0.0
    %1045 = vmatpush2.msra.mxu0 0.0
    %1046 = vmatprep.subr.mxu0 0.0
    %1047 = vmatpush2.msra.mxu0 0.0
    %1048 = vmatprep.subr.mxu0 0.0
    %1049 = vmatpush2.msra.mxu0 0.0
    %1050 = vmatprep.subr.mxu0 0.0
    %1051 = vmatpush2.msra.mxu0 0.0
    %1052 = vmatprep.subr.mxu0 0.0
    %1053 = vmatpush2.msra.mxu0 0.0
    %1054 = vmatprep.subr.mxu0 0.0
    %1055 = vmatpush2.msra.mxu0 0.0
    %1056 = vmatprep.mubr.f32.mxu0 0.0
    %1057 = vmatmul.mubr.f32.gmra.mxu0 %v991
    %v1058 = vpop.f32.mrf.mxu0
    %v1059 = vadd.f32 %v256, %v1058
    %v1060 = vpop.f32.mrf.mxu0
    %v1061 = vadd.f32 %v260, %v1060
    %1062 = vdwg.mxu0
    %v1063 = vmul.f32 %v1059, 0.5
    %v1064 = vtanh.pop %v1063
    %v1065 = vmul.f32 %v1064, 0.5
    %v1066 = vadd.f32 %v1065, 0.5
    %v1067 = vtanh.pop %v1061
    %v1068 = vmul.f32 %v1061, 0.5
    %v1069 = vtanh.pop %v1068
    %v1070 = vmul.f32 %v1069, 0.5
    %v1071 = vadd.f32 %v1070, 0.5
    %v1072 = vmul.f32 %v1066, %v886
    %v1073 = vmul.f32 %v1066, %v1067
    %1075 = vrot.lane.b32.xlu0 %v1073, 64
    %v1076 = vpop.permute.xlu0 %1075
    %v1078 = vadd.f32 %v1072, %v1076
    %v1079 = vtanh.pop %v1078
    %v1080 = vmul.f32 %v1071, %v1079
    %s1081 = smul.u32 4, 2
    %s1082 = smul.addr %s1081, 8
    %s1083 = scalar_lea.vmem [#allocation2], %s1082
    %v1084 = vld [vmem:[%s1083] sm:$0xff]
    %v1085 = vld [vmem:[%s1083 + $0x8] sm:$0xff]
    %v1086 = vsel %vm284, %v989, 0
    %1088 = vmatprep.subr.mxu0 0.0
    %1089 = vmatpush1.msra.mxu0 0.0
    %1090 = vmatprep.subr.mxu0 0.0
    %1091 = vmatpush1.msra.mxu0 0.0
    %1092 = vmatprep.subr.mxu0 0.0
    %1093 = vmatpush1.msra.mxu0 0.0
    %1094 = vmatprep.subr.mxu0 0.0
    %1095 = vmatpush1.msra.mxu0 0.0
    %1096 = vmatprep.subr.mxu0 0.0
    %1097 = vmatpush1.msra.mxu0 0.0
    %1098 = vmatprep.subr.mxu0 0.0
    %1099 = vmatpush1.msra.mxu0 0.0
    %1100 = vmatprep.subr.mxu0 0.0
    %1101 = vmatpush1.msra.mxu0 0.0
    %1102 = vmatprep.subr.mxu0 0.0
    %1103 = vmatpush1.msra.mxu0 0.0
    %1104 = vmatprep.subr.mxu0 %v283
    %1105 = vmatpush1.msra.mxu0 %v282
    %1106 = vmatprep.subr.mxu0 %v281
    %1107 = vmatpush1.msra.mxu0 %v280
    %1108 = vmatprep.subr.mxu0 %v279
    %1109 = vmatpush1.msra.mxu0 %v278
    %1110 = vmatprep.subr.mxu0 %v277
    %1111 = vmatpush1.msra.mxu0 %v276
    %1112 = vmatprep.subr.mxu0 %v275
    %1113 = vmatpush1.msra.mxu0 %v274
    %1114 = vmatprep.subr.mxu0 %v273
    %1115 = vmatpush1.msra.mxu0 %v272
    %1116 = vmatprep.subr.mxu0 %v271
    %1117 = vmatpush1.msra.mxu0 %v270
    %1118 = vmatprep.subr.mxu0 %v269
    %1119 = vmatpush1.msra.mxu0 %v268
    %1120 = vmatprep.subr.mxu0 0.0
    %1121 = vmatpush2.msra.mxu0 0.0
    %1122 = vmatprep.subr.mxu0 0.0
    %1123 = vmatpush2.msra.mxu0 0.0
    %1124 = vmatprep.subr.mxu0 0.0
    %1125 = vmatpush2.msra.mxu0 0.0
    %1126 = vmatprep.subr.mxu0 0.0
    %1127 = vmatpush2.msra.mxu0 0.0
    %1128 = vmatprep.subr.mxu0 0.0
    %1129 = vmatpush2.msra.mxu0 0.0
    %1130 = vmatprep.subr.mxu0 0.0
    %1131 = vmatpush2.msra.mxu0 0.0
    %1132 = vmatprep.subr.mxu0 0.0
    %1133 = vmatpush2.msra.mxu0 0.0
    %1134 = vmatprep.subr.mxu0 0.0
    %1135 = vmatpush2.msra.mxu0 0.0
    %1136 = vmatprep.subr.mxu0 0.0
    %1137 = vmatpush2.msra.mxu0 0.0
    %1138 = vmatprep.subr.mxu0 0.0
    %1139 = vmatpush2.msra.mxu0 0.0
    %1140 = vmatprep.subr.mxu0 0.0
    %1141 = vmatpush2.msra.mxu0 0.0
    %1142 = vmatprep.subr.mxu0 0.0
    %1143 = vmatpush2.msra.mxu0 0.0
    %1144 = vmatprep.subr.mxu0 0.0
    %1145 = vmatpush2.msra.mxu0 0.0
    %1146 = vmatprep.subr.mxu0 0.0
    %1147 = vmatpush2.msra.mxu0 0.0
    %1148 = vmatprep.subr.mxu0 0.0
    %1149 = vmatpush2.msra.mxu0 0.0
    %1150 = vmatprep.subr.mxu0 0.0
    %1151 = vmatpush2.msra.mxu0 0.0
    %1152 = vmatprep.mubr.f32.mxu0 0.0
    %1153 = vmatmul.mubr.f32.gmra.mxu0 %v1086
    %v1154 = vpop.f32.mrf.mxu0
    %v1155 = vadd.f32 0.0, %v1154
    %v1156 = vpop.f32.mrf.mxu0
    %v1157 = vadd.f32 0.0, %v1156
    %1158 = vdwg.mxu0
    %v1159 = vadd.f32 %v1084, %v1155
    %v1160 = vadd.f32 %v1085, %v1157
    %v1161 = vmul.f32 %v1159, 0.5
    %v1162 = vtanh.pop %v1161
    %v1163 = vmul.f32 %v1162, 0.5
    %v1164 = vadd.f32 %v1163, 0.5
    %v1165 = vtanh.pop %v1160
    %v1166 = vmul.f32 %v1160, 0.5
    %v1167 = vtanh.pop %v1166
    %v1168 = vmul.f32 %v1167, 0.5
    %v1169 = vadd.f32 %v1168, 0.5
    %v1170 = vmul.f32 %v1164, %v984
    %v1171 = vmul.f32 %v1164, %v1165
    %1173 = vrot.lane.b32.xlu0 %v1171, 64
    %v1174 = vpop.permute.xlu0 %1173
    %v1176 = vadd.f32 %v1170, %v1174
    %v1177 = vtanh.pop %v1176
    %v1178 = vmul.f32 %v1169, %v1177
    %1180 = vrot.lane.b32.xlu0 %v1178, 64
    %v1181 = vpop.permute.xlu0 %1180
    %v1183 = vsel %vm284, %v1181, %v1080
    %1184 = vmatprep.subr.mxu0 %v415
    %1185 = vmatpush1.msra.mxu0 %v414
    %1186 = vmatprep.subr.mxu0 %v413
    %1187 = vmatpush1.msra.mxu0 %v412
    %1188 = vmatprep.subr.mxu0 %v411
    %1189 = vmatpush1.msra.mxu0 %v410
    %1190 = vmatprep.subr.mxu0 %v409
    %1191 = vmatpush1.msra.mxu0 %v408
    %1192 = vmatprep.subr.mxu0 %v407
    %1193 = vmatpush1.msra.mxu0 %v406
    %1194 = vmatprep.subr.mxu0 %v405
    %1195 = vmatpush1.msra.mxu0 %v404
    %1196 = vmatprep.subr.mxu0 %v403
    %1197 = vmatpush1.msra.mxu0 %v402
    %1198 = vmatprep.subr.mxu0 %v401
    %1199 = vmatpush1.msra.mxu0 %v400
    %1200 = vmatprep.subr.mxu0 %v399
    %1201 = vmatpush1.msra.mxu0 %v398
    %1202 = vmatprep.subr.mxu0 %v397
    %1203 = vmatpush1.msra.mxu0 %v396
    %1204 = vmatprep.subr.mxu0 %v395
    %1205 = vmatpush1.msra.mxu0 %v394
    %1206 = vmatprep.subr.mxu0 %v393
    %1207 = vmatpush1.msra.mxu0 %v392
    %1208 = vmatprep.subr.mxu0 %v391
    %1209 = vmatpush1.msra.mxu0 %v390
    %1210 = vmatprep.subr.mxu0 %v389
    %1211 = vmatpush1.msra.mxu0 %v388
    %1212 = vmatprep.subr.mxu0 %v387
    %1213 = vmatpush1.msra.mxu0 %v386
    %1214 = vmatprep.subr.mxu0 %v385
    %1215 = vmatpush1.msra.mxu0 %v384
    %1216 = vmatprep.subr.mxu0 0.0
    %1217 = vmatpush2.msra.mxu0 0.0
    %1218 = vmatprep.subr.mxu0 0.0
    %1219 = vmatpush2.msra.mxu0 0.0
    %1220 = vmatprep.subr.mxu0 0.0
    %1221 = vmatpush2.msra.mxu0 0.0
    %1222 = vmatprep.subr.mxu0 0.0
    %1223 = vmatpush2.msra.mxu0 0.0
    %1224 = vmatprep.subr.mxu0 0.0
    %1225 = vmatpush2.msra.mxu0 0.0
    %1226 = vmatprep.subr.mxu0 0.0
    %1227 = vmatpush2.msra.mxu0 0.0
    %1228 = vmatprep.subr.mxu0 0.0
    %1229 = vmatpush2.msra.mxu0 0.0
    %1230 = vmatprep.subr.mxu0 0.0
    %1231 = vmatpush2.msra.mxu0 0.0
    %1232 = vmatprep.subr.mxu0 0.0
    %1233 = vmatpush2.msra.mxu0 0.0
    %1234 = vmatprep.subr.mxu0 0.0
    %1235 = vmatpush2.msra.mxu0 0.0
    %1236 = vmatprep.subr.mxu0 0.0
    %1237 = vmatpush2.msra.mxu0 0.0
    %1238 = vmatprep.subr.mxu0 0.0
    %1239 = vmatpush2.msra.mxu0 0.0
    %1240 = vmatprep.subr.mxu0 0.0
    %1241 = vmatpush2.msra.mxu0 0.0
    %1242 = vmatprep.subr.mxu0 0.0
    %1243 = vmatpush2.msra.mxu0 0.0
    %1244 = vmatprep.subr.mxu0 0.0
    %1245 = vmatpush2.msra.mxu0 0.0
    %1246 = vmatprep.subr.mxu0 0.0
    %1247 = vmatpush2.msra.mxu0 0.0
    %1248 = vmatprep.mubr.f32.mxu0 0.0
    %1249 = vmatmul.mubr.f32.gmra.mxu0 %v1183
    %v1250 = vpop.f32.mrf.mxu0
    %v1251 = vadd.f32 %v256, %v1250
    %v1252 = vpop.f32.mrf.mxu0
    %v1253 = vadd.f32 %v260, %v1252
    %1254 = vdwg.mxu0
    %v1255 = vmul.f32 %v1251, 0.5
    %v1256 = vtanh.pop %v1255
    %v1257 = vmul.f32 %v1256, 0.5
    %v1258 = vadd.f32 %v1257, 0.5
    %v1259 = vtanh.pop %v1253
    %v1260 = vmul.f32 %v1253, 0.5
    %v1261 = vtanh.pop %v1260
    %v1262 = vmul.f32 %v1261, 0.5
    %v1263 = vadd.f32 %v1262, 0.5
    %v1264 = vmul.f32 %v1258, %v1078
    %v1265 = vmul.f32 %v1258, %v1259
    %1267 = vrot.lane.b32.xlu0 %v1265, 64
    %v1268 = vpop.permute.xlu0 %1267
    %v1270 = vadd.f32 %v1264, %v1268
    %v1271 = vtanh.pop %v1270
    %v1272 = vmul.f32 %v1263, %v1271
    %s1273 = smul.u32 5, 2
    %s1274 = smul.addr %s1273, 8
    %s1275 = scalar_lea.vmem [#allocation2], %s1274
    %v1276 = vld [vmem:[%s1275] sm:$0xff]
    %v1277 = vld [vmem:[%s1275 + $0x8] sm:$0xff]
    %v1278 = vsel %vm284, %v1181, 0
    %1280 = vmatprep.subr.mxu0 0.0
    %1281 = vmatpush1.msra.mxu0 0.0
    %1282 = vmatprep.subr.mxu0 0.0
    %1283 = vmatpush1.msra.mxu0 0.0
    %1284 = vmatprep.subr.mxu0 0.0
    %1285 = vmatpush1.msra.mxu0 0.0
    %1286 = vmatprep.subr.mxu0 0.0
    %1287 = vmatpush1.msra.mxu0 0.0
    %1288 = vmatprep.subr.mxu0 0.0
    %1289 = vmatpush1.msra.mxu0 0.0
    %1290 = vmatprep.subr.mxu0 0.0
    %1291 = vmatpush1.msra.mxu0 0.0
    %1292 = vmatprep.subr.mxu0 0.0
    %1293 = vmatpush1.msra.mxu0 0.0
    %1294 = vmatprep.subr.mxu0 0.0
    %1295 = vmatpush1.msra.mxu0 0.0
    %1296 = vmatprep.subr.mxu0 %v283
    %1297 = vmatpush1.msra.mxu0 %v282
    %1298 = vmatprep.subr.mxu0 %v281
    %1299 = vmatpush1.msra.mxu0 %v280
    %1300 = vmatprep.subr.mxu0 %v279
    %1301 = vmatpush1.msra.mxu0 %v278
    %1302 = vmatprep.subr.mxu0 %v277
    %1303 = vmatpush1.msra.mxu0 %v276
    %1304 = vmatprep.subr.mxu0 %v275
    %1305 = vmatpush1.msra.mxu0 %v274
    %1306 = vmatprep.subr.mxu0 %v273
    %1307 = vmatpush1.msra.mxu0 %v272
    %1308 = vmatprep.subr.mxu0 %v271
    %1309 = vmatpush1.msra.mxu0 %v270
    %1310 = vmatprep.subr.mxu0 %v269
    %1311 = vmatpush1.msra.mxu0 %v268
    %1312 = vmatprep.subr.mxu0 0.0
    %1313 = vmatpush2.msra.mxu0 0.0
    %1314 = vmatprep.subr.mxu0 0.0
    %1315 = vmatpush2.msra.mxu0 0.0
    %1316 = vmatprep.subr.mxu0 0.0
    %1317 = vmatpush2.msra.mxu0 0.0
    %1318 = vmatprep.subr.mxu0 0.0
    %1319 = vmatpush2.msra.mxu0 0.0
    %1320 = vmatprep.subr.mxu0 0.0
    %1321 = vmatpush2.msra.mxu0 0.0
    %1322 = vmatprep.subr.mxu0 0.0
    %1323 = vmatpush2.msra.mxu0 0.0
    %1324 = vmatprep.subr.mxu0 0.0
    %1325 = vmatpush2.msra.mxu0 0.0
    %1326 = vmatprep.subr.mxu0 0.0
    %1327 = vmatpush2.msra.mxu0 0.0
    %1328 = vmatprep.subr.mxu0 0.0
    %1329 = vmatpush2.msra.mxu0 0.0
    %1330 = vmatprep.subr.mxu0 0.0
    %1331 = vmatpush2.msra.mxu0 0.0
    %1332 = vmatprep.subr.mxu0 0.0
    %1333 = vmatpush2.msra.mxu0 0.0
    %1334 = vmatprep.subr.mxu0 0.0
    %1335 = vmatpush2.msra.mxu0 0.0
    %1336 = vmatprep.subr.mxu0 0.0
    %1337 = vmatpush2.msra.mxu0 0.0
    %1338 = vmatprep.subr.mxu0 0.0
    %1339 = vmatpush2.msra.mxu0 0.0
    %1340 = vmatprep.subr.mxu0 0.0
    %1341 = vmatpush2.msra.mxu0 0.0
    %1342 = vmatprep.subr.mxu0 0.0
    %1343 = vmatpush2.msra.mxu0 0.0
    %1344 = vmatprep.mubr.f32.mxu0 0.0
    %1345 = vmatmul.mubr.f32.gmra.mxu0 %v1278
    %v1346 = vpop.f32.mrf.mxu0
    %v1347 = vadd.f32 0.0, %v1346
    %v1348 = vpop.f32.mrf.mxu0
    %v1349 = vadd.f32 0.0, %v1348
    %1350 = vdwg.mxu0
    %v1351 = vadd.f32 %v1276, %v1347
    %v1352 = vadd.f32 %v1277, %v1349
    %v1353 = vmul.f32 %v1351, 0.5
    %v1354 = vtanh.pop %v1353
    %v1355 = vmul.f32 %v1354, 0.5
    %v1356 = vadd.f32 %v1355, 0.5
    %v1357 = vtanh.pop %v1352
    %v1358 = vmul.f32 %v1352, 0.5
    %v1359 = vtanh.pop %v1358
    %v1360 = vmul.f32 %v1359, 0.5
    %v1361 = vadd.f32 %v1360, 0.5
    %v1362 = vmul.f32 %v1356, %v1176
    %v1363 = vmul.f32 %v1356, %v1357
    %1365 = vrot.lane.b32.xlu0 %v1363, 64
    %v1366 = vpop.permute.xlu0 %1365
    %v1368 = vadd.f32 %v1362, %v1366
    %v1369 = vtanh.pop %v1368
    %v1370 = vmul.f32 %v1361, %v1369
    %1372 = vrot.lane.b32.xlu0 %v1370, 64
    %v1373 = vpop.permute.xlu0 %1372
    %v1375 = vsel %vm284, %v1373, %v1272
    %1376 = vmatprep.subr.mxu0 %v415
    %1377 = vmatpush1.msra.mxu0 %v414
    %1378 = vmatprep.subr.mxu0 %v413
    %1379 = vmatpush1.msra.mxu0 %v412
    %1380 = vmatprep.subr.mxu0 %v411
    %1381 = vmatpush1.msra.mxu0 %v410
    %1382 = vmatprep.subr.mxu0 %v409
    %1383 = vmatpush1.msra.mxu0 %v408
    %1384 = vmatprep.subr.mxu0 %v407
    %1385 = vmatpush1.msra.mxu0 %v406
    %1386 = vmatprep.subr.mxu0 %v405
    %1387 = vmatpush1.msra.mxu0 %v404
    %1388 = vmatprep.subr.mxu0 %v403
    %1389 = vmatpush1.msra.mxu0 %v402
    %1390 = vmatprep.subr.mxu0 %v401
    %1391 = vmatpush1.msra.mxu0 %v400
    %1392 = vmatprep.subr.mxu0 %v399
    %1393 = vmatpush1.msra.mxu0 %v398
    %1394 = vmatprep.subr.mxu0 %v397
    %1395 = vmatpush1.msra.mxu0 %v396
    %1396 = vmatprep.subr.mxu0 %v395
    %1397 = vmatpush1.msra.mxu0 %v394
    %1398 = vmatprep.subr.mxu0 %v393
    %1399 = vmatpush1.msra.mxu0 %v392
    %1400 = vmatprep.subr.mxu0 %v391
    %1401 = vmatpush1.msra.mxu0 %v390
    %1402 = vmatprep.subr.mxu0 %v389
    %1403 = vmatpush1.msra.mxu0 %v388
    %1404 = vmatprep.subr.mxu0 %v387
    %1405 = vmatpush1.msra.mxu0 %v386
    %1406 = vmatprep.subr.mxu0 %v385
    %1407 = vmatpush1.msra.mxu0 %v384
    %1408 = vmatprep.subr.mxu0 0.0
    %1409 = vmatpush2.msra.mxu0 0.0
    %1410 = vmatprep.subr.mxu0 0.0
    %1411 = vmatpush2.msra.mxu0 0.0
    %1412 = vmatprep.subr.mxu0 0.0
    %1413 = vmatpush2.msra.mxu0 0.0
    %1414 = vmatprep.subr.mxu0 0.0
    %1415 = vmatpush2.msra.mxu0 0.0
    %1416 = vmatprep.subr.mxu0 0.0
    %1417 = vmatpush2.msra.mxu0 0.0
    %1418 = vmatprep.subr.mxu0 0.0
    %1419 = vmatpush2.msra.mxu0 0.0
    %1420 = vmatprep.subr.mxu0 0.0
    %1421 = vmatpush2.msra.mxu0 0.0
    %1422 = vmatprep.subr.mxu0 0.0
    %1423 = vmatpush2.msra.mxu0 0.0
    %1424 = vmatprep.subr.mxu0 0.0
    %1425 = vmatpush2.msra.mxu0 0.0
    %1426 = vmatprep.subr.mxu0 0.0
    %1427 = vmatpush2.msra.mxu0 0.0
    %1428 = vmatprep.subr.mxu0 0.0
    %1429 = vmatpush2.msra.mxu0 0.0
    %1430 = vmatprep.subr.mxu0 0.0
    %1431 = vmatpush2.msra.mxu0 0.0
    %1432 = vmatprep.subr.mxu0 0.0
    %1433 = vmatpush2.msra.mxu0 0.0
    %1434 = vmatprep.subr.mxu0 0.0
    %1435 = vmatpush2.msra.mxu0 0.0
    %1436 = vmatprep.subr.mxu0 0.0
    %1437 = vmatpush2.msra.mxu0 0.0
    %1438 = vmatprep.subr.mxu0 0.0
    %1439 = vmatpush2.msra.mxu0 0.0
    %1440 = vmatprep.mubr.f32.mxu0 0.0
    %1441 = vmatmul.mubr.f32.gmra.mxu0 %v1375
    %v1442 = vpop.f32.mrf.mxu0
    %v1443 = vadd.f32 %v256, %v1442
    %v1444 = vpop.f32.mrf.mxu0
    %v1445 = vadd.f32 %v260, %v1444
    %1446 = vdwg.mxu0
    %v1447 = vmul.f32 %v1443, 0.5
    %v1448 = vtanh.pop %v1447
    %v1449 = vmul.f32 %v1448, 0.5
    %v1450 = vadd.f32 %v1449, 0.5
    %v1451 = vtanh.pop %v1445
    %v1452 = vmul.f32 %v1445, 0.5
    %v1453 = vtanh.pop %v1452
    %v1454 = vmul.f32 %v1453, 0.5
    %v1455 = vadd.f32 %v1454, 0.5
    %v1456 = vmul.f32 %v1450, %v1270
    %v1457 = vmul.f32 %v1450, %v1451
    %1459 = vrot.lane.b32.xlu0 %v1457, 64
    %v1460 = vpop.permute.xlu0 %1459
    %v1462 = vadd.f32 %v1456, %v1460
    %v1463 = vtanh.pop %v1462
    %v1464 = vmul.f32 %v1455, %v1463
    %s1465 = smul.u32 6, 2
    %s1466 = smul.addr %s1465, 8
    %s1467 = scalar_lea.vmem [#allocation2], %s1466
    %v1468 = vld [vmem:[%s1467] sm:$0xff]
    %v1469 = vld [vmem:[%s1467 + $0x8] sm:$0xff]
    %v1470 = vsel %vm284, %v1373, 0
    %1472 = vmatprep.subr.mxu0 0.0
    %1473 = vmatpush1.msra.mxu0 0.0
    %1474 = vmatprep.subr.mxu0 0.0
    %1475 = vmatpush1.msra.mxu0 0.0
    %1476 = vmatprep.subr.mxu0 0.0
    %1477 = vmatpush1.msra.mxu0 0.0
    %1478 = vmatprep.subr.mxu0 0.0
    %1479 = vmatpush1.msra.mxu0 0.0
    %1480 = vmatprep.subr.mxu0 0.0
    %1481 = vmatpush1.msra.mxu0 0.0
    %1482 = vmatprep.subr.mxu0 0.0
    %1483 = vmatpush1.msra.mxu0 0.0
    %1484 = vmatprep.subr.mxu0 0.0
    %1485 = vmatpush1.msra.mxu0 0.0
    %1486 = vmatprep.subr.mxu0 0.0
    %1487 = vmatpush1.msra.mxu0 0.0
    %1488 = vmatprep.subr.mxu0 %v283
    %1489 = vmatpush1.msra.mxu0 %v282
    %1490 = vmatprep.subr.mxu0 %v281
    %1491 = vmatpush1.msra.mxu0 %v280
    %1492 = vmatprep.subr.mxu0 %v279
    %1493 = vmatpush1.msra.mxu0 %v278
    %1494 = vmatprep.subr.mxu0 %v277
    %1495 = vmatpush1.msra.mxu0 %v276
    %1496 = vmatprep.subr.mxu0 %v275
    %1497 = vmatpush1.msra.mxu0 %v274
    %1498 = vmatprep.subr.mxu0 %v273
    %1499 = vmatpush1.msra.mxu0 %v272
    %1500 = vmatprep.subr.mxu0 %v271
    %1501 = vmatpush1.msra.mxu0 %v270
    %1502 = vmatprep.subr.mxu0 %v269
    %1503 = vmatpush1.msra.mxu0 %v268
    %1504 = vmatprep.subr.mxu0 0.0
    %1505 = vmatpush2.msra.mxu0 0.0
    %1506 = vmatprep.subr.mxu0 0.0
    %1507 = vmatpush2.msra.mxu0 0.0
    %1508 = vmatprep.subr.mxu0 0.0
    %1509 = vmatpush2.msra.mxu0 0.0
    %1510 = vmatprep.subr.mxu0 0.0
    %1511 = vmatpush2.msra.mxu0 0.0
    %1512 = vmatprep.subr.mxu0 0.0
    %1513 = vmatpush2.msra.mxu0 0.0
    %1514 = vmatprep.subr.mxu0 0.0
    %1515 = vmatpush2.msra.mxu0 0.0
    %1516 = vmatprep.subr.mxu0 0.0
    %1517 = vmatpush2.msra.mxu0 0.0
    %1518 = vmatprep.subr.mxu0 0.0
    %1519 = vmatpush2.msra.mxu0 0.0
    %1520 = vmatprep.subr.mxu0 0.0
    %1521 = vmatpush2.msra.mxu0 0.0
    %1522 = vmatprep.subr.mxu0 0.0
    %1523 = vmatpush2.msra.mxu0 0.0
    %1524 = vmatprep.subr.mxu0 0.0
    %1525 = vmatpush2.msra.mxu0 0.0
    %1526 = vmatprep.subr.mxu0 0.0
    %1527 = vmatpush2.msra.mxu0 0.0
    %1528 = vmatprep.subr.mxu0 0.0
    %1529 = vmatpush2.msra.mxu0 0.0
    %1530 = vmatprep.subr.mxu0 0.0
    %1531 = vmatpush2.msra.mxu0 0.0
    %1532 = vmatprep.subr.mxu0 0.0
    %1533 = vmatpush2.msra.mxu0 0.0
    %1534 = vmatprep.subr.mxu0 0.0
    %1535 = vmatpush2.msra.mxu0 0.0
    %1536 = vmatprep.mubr.f32.mxu0 0.0
    %1537 = vmatmul.mubr.f32.gmra.mxu0 %v1470
    %v1538 = vpop.f32.mrf.mxu0
    %v1539 = vadd.f32 0.0, %v1538
    %v1540 = vpop.f32.mrf.mxu0
    %v1541 = vadd.f32 0.0, %v1540
    %1542 = vdwg.mxu0
    %v1543 = vadd.f32 %v1468, %v1539
    %v1544 = vadd.f32 %v1469, %v1541
    %v1545 = vmul.f32 %v1543, 0.5
    %v1546 = vtanh.pop %v1545
    %v1547 = vmul.f32 %v1546, 0.5
    %v1548 = vadd.f32 %v1547, 0.5
    %v1549 = vtanh.pop %v1544
    %v1550 = vmul.f32 %v1544, 0.5
    %v1551 = vtanh.pop %v1550
    %v1552 = vmul.f32 %v1551, 0.5
    %v1553 = vadd.f32 %v1552, 0.5
    %v1554 = vmul.f32 %v1548, %v1368
    %v1555 = vmul.f32 %v1548, %v1549
    %1557 = vrot.lane.b32.xlu0 %v1555, 64
    %v1558 = vpop.permute.xlu0 %1557
    %v1560 = vadd.f32 %v1554, %v1558
    %v1561 = vtanh.pop %v1560
    %v1562 = vmul.f32 %v1553, %v1561
    %1564 = vrot.lane.b32.xlu0 %v1562, 64
    %v1565 = vpop.permute.xlu0 %1564
    %v1567 = vsel %vm284, %v1565, %v1464
    %1568 = vmatprep.subr.mxu0 %v415
    %1569 = vmatpush1.msra.mxu0 %v414
    %1570 = vmatprep.subr.mxu0 %v413
    %1571 = vmatpush1.msra.mxu0 %v412
    %1572 = vmatprep.subr.mxu0 %v411
    %1573 = vmatpush1.msra.mxu0 %v410
    %1574 = vmatprep.subr.mxu0 %v409
    %1575 = vmatpush1.msra.mxu0 %v408
    %1576 = vmatprep.subr.mxu0 %v407
    %1577 = vmatpush1.msra.mxu0 %v406
    %1578 = vmatprep.subr.mxu0 %v405
    %1579 = vmatpush1.msra.mxu0 %v404
    %1580 = vmatprep.subr.mxu0 %v403
    %1581 = vmatpush1.msra.mxu0 %v402
    %1582 = vmatprep.subr.mxu0 %v401
    %1583 = vmatpush1.msra.mxu0 %v400
    %1584 = vmatprep.subr.mxu0 %v399
    %1585 = vmatpush1.msra.mxu0 %v398
    %1586 = vmatprep.subr.mxu0 %v397
    %1587 = vmatpush1.msra.mxu0 %v396
    %1588 = vmatprep.subr.mxu0 %v395
    %1589 = vmatpush1.msra.mxu0 %v394
    %1590 = vmatprep.subr.mxu0 %v393
    %1591 = vmatpush1.msra.mxu0 %v392
    %1592 = vmatprep.subr.mxu0 %v391
    %1593 = vmatpush1.msra.mxu0 %v390
    %1594 = vmatprep.subr.mxu0 %v389
    %1595 = vmatpush1.msra.mxu0 %v388
    %1596 = vmatprep.subr.mxu0 %v387
    %1597 = vmatpush1.msra.mxu0 %v386
    %1598 = vmatprep.subr.mxu0 %v385
    %1599 = vmatpush1.msra.mxu0 %v384
    %1600 = vmatprep.subr.mxu0 0.0
    %1601 = vmatpush2.msra.mxu0 0.0
    %1602 = vmatprep.subr.mxu0 0.0
    %1603 = vmatpush2.msra.mxu0 0.0
    %1604 = vmatprep.subr.mxu0 0.0
    %1605 = vmatpush2.msra.mxu0 0.0
    %1606 = vmatprep.subr.mxu0 0.0
    %1607 = vmatpush2.msra.mxu0 0.0
    %1608 = vmatprep.subr.mxu0 0.0
    %1609 = vmatpush2.msra.mxu0 0.0
    %1610 = vmatprep.subr.mxu0 0.0
    %1611 = vmatpush2.msra.mxu0 0.0
    %1612 = vmatprep.subr.mxu0 0.0
    %1613 = vmatpush2.msra.mxu0 0.0
    %1614 = vmatprep.subr.mxu0 0.0
    %1615 = vmatpush2.msra.mxu0 0.0
    %1616 = vmatprep.subr.mxu0 0.0
    %1617 = vmatpush2.msra.mxu0 0.0
    %1618 = vmatprep.subr.mxu0 0.0
    %1619 = vmatpush2.msra.mxu0 0.0
    %1620 = vmatprep.subr.mxu0 0.0
    %1621 = vmatpush2.msra.mxu0 0.0
    %1622 = vmatprep.subr.mxu0 0.0
    %1623 = vmatpush2.msra.mxu0 0.0
    %1624 = vmatprep.subr.mxu0 0.0
    %1625 = vmatpush2.msra.mxu0 0.0
    %1626 = vmatprep.subr.mxu0 0.0
    %1627 = vmatpush2.msra.mxu0 0.0
    %1628 = vmatprep.subr.mxu0 0.0
    %1629 = vmatpush2.msra.mxu0 0.0
    %1630 = vmatprep.subr.mxu0 0.0
    %1631 = vmatpush2.msra.mxu0 0.0
    %1632 = vmatprep.mubr.f32.mxu0 0.0
    %1633 = vmatmul.mubr.f32.gmra.mxu0 %v1567
    %v1634 = vpop.f32.mrf.mxu0
    %v1635 = vadd.f32 %v256, %v1634
    %v1636 = vpop.f32.mrf.mxu0
    %v1637 = vadd.f32 %v260, %v1636
    %1638 = vdwg.mxu0
    %v1639 = vmul.f32 %v1635, 0.5
    %v1640 = vtanh.pop %v1639
    %v1641 = vmul.f32 %v1640, 0.5
    %v1642 = vadd.f32 %v1641, 0.5
    %v1643 = vtanh.pop %v1637
    %v1644 = vmul.f32 %v1637, 0.5
    %v1645 = vtanh.pop %v1644
    %v1646 = vmul.f32 %v1645, 0.5
    %v1647 = vadd.f32 %v1646, 0.5
    %v1648 = vmul.f32 %v1642, %v1462
    %v1649 = vmul.f32 %v1642, %v1643
    %1651 = vrot.lane.b32.xlu0 %v1649, 64
    %v1652 = vpop.permute.xlu0 %1651
    %v1654 = vadd.f32 %v1648, %v1652
    %v1655 = vtanh.pop %v1654
    %v1656 = vmul.f32 %v1647, %v1655
    %s1657 = smul.u32 7, 2
    %s1658 = smul.addr %s1657, 8
    %s1659 = scalar_lea.vmem [#allocation2], %s1658
    %v1660 = vld [vmem:[%s1659] sm:$0xff]
    %v1661 = vld [vmem:[%s1659 + $0x8] sm:$0xff]
    %v1662 = vsel %vm284, %v1565, 0
    %1664 = vmatprep.subr.mxu0 0.0
    %1665 = vmatpush1.msra.mxu0 0.0
    %1666 = vmatprep.subr.mxu0 0.0
    %1667 = vmatpush1.msra.mxu0 0.0
    %1668 = vmatprep.subr.mxu0 0.0
    %1669 = vmatpush1.msra.mxu0 0.0
    %1670 = vmatprep.subr.mxu0 0.0
    %1671 = vmatpush1.msra.mxu0 0.0
    %1672 = vmatprep.subr.mxu0 0.0
    %1673 = vmatpush1.msra.mxu0 0.0
    %1674 = vmatprep.subr.mxu0 0.0
    %1675 = vmatpush1.msra.mxu0 0.0
    %1676 = vmatprep.subr.mxu0 0.0
    %1677 = vmatpush1.msra.mxu0 0.0
    %1678 = vmatprep.subr.mxu0 0.0
    %1679 = vmatpush1.msra.mxu0 0.0
    %1680 = vmatprep.subr.mxu0 %v283
    %1681 = vmatpush1.msra.mxu0 %v282
    %1682 = vmatprep.subr.mxu0 %v281
    %1683 = vmatpush1.msra.mxu0 %v280
    %1684 = vmatprep.subr.mxu0 %v279
    %1685 = vmatpush1.msra.mxu0 %v278
    %1686 = vmatprep.subr.mxu0 %v277
    %1687 = vmatpush1.msra.mxu0 %v276
    %1688 = vmatprep.subr.mxu0 %v275
    %1689 = vmatpush1.msra.mxu0 %v274
    %1690 = vmatprep.subr.mxu0 %v273
    %1691 = vmatpush1.msra.mxu0 %v272
    %1692 = vmatprep.subr.mxu0 %v271
    %1693 = vmatpush1.msra.mxu0 %v270
    %1694 = vmatprep.subr.mxu0 %v269
    %1695 = vmatpush1.msra.mxu0 %v268
    %1696 = vmatprep.subr.mxu0 0.0
    %1697 = vmatpush2.msra.mxu0 0.0
    %1698 = vmatprep.subr.mxu0 0.0
    %1699 = vmatpush2.msra.mxu0 0.0
    %1700 = vmatprep.subr.mxu0 0.0
    %1701 = vmatpush2.msra.mxu0 0.0
    %1702 = vmatprep.subr.mxu0 0.0
    %1703 = vmatpush2.msra.mxu0 0.0
    %1704 = vmatprep.subr.mxu0 0.0
    %1705 = vmatpush2.msra.mxu0 0.0
    %1706 = vmatprep.subr.mxu0 0.0
    %1707 = vmatpush2.msra.mxu0 0.0
    %1708 = vmatprep.subr.mxu0 0.0
    %1709 = vmatpush2.msra.mxu0 0.0
    %1710 = vmatprep.subr.mxu0 0.0
    %1711 = vmatpush2.msra.mxu0 0.0
    %1712 = vmatprep.subr.mxu0 0.0
    %1713 = vmatpush2.msra.mxu0 0.0
    %1714 = vmatprep.subr.mxu0 0.0
    %1715 = vmatpush2.msra.mxu0 0.0
    %1716 = vmatprep.subr.mxu0 0.0
    %1717 = vmatpush2.msra.mxu0 0.0
    %1718 = vmatprep.subr.mxu0 0.0
    %1719 = vmatpush2.msra.mxu0 0.0
    %1720 = vmatprep.subr.mxu0 0.0
    %1721 = vmatpush2.msra.mxu0 0.0
    %1722 = vmatprep.subr.mxu0 0.0
    %1723 = vmatpush2.msra.mxu0 0.0
    %1724 = vmatprep.subr.mxu0 0.0
    %1725 = vmatpush2.msra.mxu0 0.0
    %1726 = vmatprep.subr.mxu0 0.0
    %1727 = vmatpush2.msra.mxu0 0.0
    %1728 = vmatprep.mubr.f32.mxu0 0.0
    %1729 = vmatmul.mubr.f32.gmra.mxu0 %v1662
    %v1730 = vpop.f32.mrf.mxu0
    %v1731 = vadd.f32 0.0, %v1730
    %v1732 = vpop.f32.mrf.mxu0
    %v1733 = vadd.f32 0.0, %v1732
    %1734 = vdwg.mxu0
    %v1735 = vadd.f32 %v1660, %v1731
    %v1736 = vadd.f32 %v1661, %v1733
    %v1737 = vmul.f32 %v1735, 0.5
    %v1738 = vtanh.pop %v1737
    %v1739 = vmul.f32 %v1738, 0.5
    %v1740 = vadd.f32 %v1739, 0.5
    %v1741 = vtanh.pop %v1736
    %v1742 = vmul.f32 %v1736, 0.5
    %v1743 = vtanh.pop %v1742
    %v1744 = vmul.f32 %v1743, 0.5
    %v1745 = vadd.f32 %v1744, 0.5
    %v1746 = vmul.f32 %v1740, %v1560
    %v1747 = vmul.f32 %v1740, %v1741
    %1749 = vrot.lane.b32.xlu0 %v1747, 64
    %v1750 = vpop.permute.xlu0 %1749
    %v1752 = vadd.f32 %v1746, %v1750
    %v1753 = vtanh.pop %v1752
    %v1754 = vmul.f32 %v1745, %v1753
    %1756 = vrot.lane.b32.xlu0 %v1754, 64
    %v1757 = vpop.permute.xlu0 %1756
    %v1759 = vsel %vm284, %v1757, %v1656
    %1760 = vmatprep.subr.mxu0 %v415
    %1761 = vmatpush1.msra.mxu0 %v414
    %1762 = vmatprep.subr.mxu0 %v413
    %1763 = vmatpush1.msra.mxu0 %v412
    %1764 = vmatprep.subr.mxu0 %v411
    %1765 = vmatpush1.msra.mxu0 %v410
    %1766 = vmatprep.subr.mxu0 %v409
    %1767 = vmatpush1.msra.mxu0 %v408
    %1768 = vmatprep.subr.mxu0 %v407
    %1769 = vmatpush1.msra.mxu0 %v406
    %1770 = vmatprep.subr.mxu0 %v405
    %1771 = vmatpush1.msra.mxu0 %v404
    %1772 = vmatprep.subr.mxu0 %v403
    %1773 = vmatpush1.msra.mxu0 %v402
    %1774 = vmatprep.subr.mxu0 %v401
    %1775 = vmatpush1.msra.mxu0 %v400
    %1776 = vmatprep.subr.mxu0 %v399
    %1777 = vmatpush1.msra.mxu0 %v398
    %1778 = vmatprep.subr.mxu0 %v397
    %1779 = vmatpush1.msra.mxu0 %v396
    %1780 = vmatprep.subr.mxu0 %v395
    %1781 = vmatpush1.msra.mxu0 %v394
    %1782 = vmatprep.subr.mxu0 %v393
    %1783 = vmatpush1.msra.mxu0 %v392
    %1784 = vmatprep.subr.mxu0 %v391
    %1785 = vmatpush1.msra.mxu0 %v390
    %1786 = vmatprep.subr.mxu0 %v389
    %1787 = vmatpush1.msra.mxu0 %v388
    %1788 = vmatprep.subr.mxu0 %v387
    %1789 = vmatpush1.msra.mxu0 %v386
    %1790 = vmatprep.subr.mxu0 %v385
    %1791 = vmatpush1.msra.mxu0 %v384
    %1792 = vmatprep.subr.mxu0 0.0
    %1793 = vmatpush2.msra.mxu0 0.0
    %1794 = vmatprep.subr.mxu0 0.0
    %1795 = vmatpush2.msra.mxu0 0.0
    %1796 = vmatprep.subr.mxu0 0.0
    %1797 = vmatpush2.msra.mxu0 0.0
    %1798 = vmatprep.subr.mxu0 0.0
    %1799 = vmatpush2.msra.mxu0 0.0
    %1800 = vmatprep.subr.mxu0 0.0
    %1801 = vmatpush2.msra.mxu0 0.0
    %1802 = vmatprep.subr.mxu0 0.0
    %1803 = vmatpush2.msra.mxu0 0.0
    %1804 = vmatprep.subr.mxu0 0.0
    %1805 = vmatpush2.msra.mxu0 0.0
    %1806 = vmatprep.subr.mxu0 0.0
    %1807 = vmatpush2.msra.mxu0 0.0
    %1808 = vmatprep.subr.mxu0 0.0
    %1809 = vmatpush2.msra.mxu0 0.0
    %1810 = vmatprep.subr.mxu0 0.0
    %1811 = vmatpush2.msra.mxu0 0.0
    %1812 = vmatprep.subr.mxu0 0.0
    %1813 = vmatpush2.msra.mxu0 0.0
    %1814 = vmatprep.subr.mxu0 0.0
    %1815 = vmatpush2.msra.mxu0 0.0
    %1816 = vmatprep.subr.mxu0 0.0
    %1817 = vmatpush2.msra.mxu0 0.0
    %1818 = vmatprep.subr.mxu0 0.0
    %1819 = vmatpush2.msra.mxu0 0.0
    %1820 = vmatprep.subr.mxu0 0.0
    %1821 = vmatpush2.msra.mxu0 0.0
    %1822 = vmatprep.subr.mxu0 0.0
    %1823 = vmatpush2.msra.mxu0 0.0
    %1824 = vmatprep.mubr.f32.mxu0 0.0
    %1825 = vmatmul.mubr.f32.gmra.mxu0 %v1759
    %v1826 = vpop.f32.mrf.mxu0
    %v1827 = vadd.f32 %v256, %v1826
    %v1828 = vpop.f32.mrf.mxu0
    %v1829 = vadd.f32 %v260, %v1828
    %1830 = vdwg.mxu0
    %v1831 = vmul.f32 %v1827, 0.5
    %v1832 = vtanh.pop %v1831
    %v1833 = vmul.f32 %v1832, 0.5
    %v1834 = vadd.f32 %v1833, 0.5
    %v1835 = vtanh.pop %v1829
    %v1836 = vmul.f32 %v1829, 0.5
    %v1837 = vtanh.pop %v1836
    %v1838 = vmul.f32 %v1837, 0.5
    %v1839 = vadd.f32 %v1838, 0.5
    %v1840 = vmul.f32 %v1834, %v1654
    %v1841 = vmul.f32 %v1834, %v1835
    %1843 = vrot.lane.b32.xlu0 %v1841, 64
    %v1844 = vpop.permute.xlu0 %1843
    %v1846 = vadd.f32 %v1840, %v1844
    %v1847 = vtanh.pop %v1846
    %v1848 = vmul.f32 %v1839, %v1847
    %v1849 = vld [vmem:[%s6] sm:$0xff]
    %v1850 = vld [vmem:[%s6 + $0x8] sm:$0xff]
    %v1851 = vld [vmem:[%s6 + $0x10] sm:$0xff]
    %v1852 = vld [vmem:[%s6 + $0x18] sm:$0xff]
    %v1853 = vld [vmem:[%s6 + $0x20] sm:$0xff]
    %v1854 = vld [vmem:[%s6 + $0x28] sm:$0xff]
    %v1855 = vld [vmem:[%s6 + $0x30] sm:$0xff]
    %v1856 = vld [vmem:[%s6 + $0x38] sm:$0xff]
    %v1857 = vld [vmem:[%s7] sm:$0x1]
    %v1859 = vlaneseq
    %v1860 = vshrl.u32 %v1859, 7
    %v1861 = vsub.s32 0, %v1860
    %v1862 = vrot.slane %v1857, %v1861
    %1865 = vrot.lane.b32.xlu0 %v1848, 64
    %v1866 = vpop.permute.xlu0 %1865
    %v1867 = vsel %vm284, %v1866, 0
    %1869 = vmatprep.subr.mxu0 0.0
    %1870 = vmatpush1.msra.mxu0 0.0
    %1871 = vmatprep.subr.mxu0 0.0
    %1872 = vmatpush1.msra.mxu0 0.0
    %1873 = vmatprep.subr.mxu0 0.0
    %1874 = vmatpush1.msra.mxu0 0.0
    %1875 = vmatprep.subr.mxu0 0.0
    %1876 = vmatpush1.msra.mxu0 0.0
    %1877 = vmatprep.subr.mxu0 0.0
    %1878 = vmatpush1.msra.mxu0 0.0
    %1879 = vmatprep.subr.mxu0 0.0
    %1880 = vmatpush1.msra.mxu0 0.0
    %1881 = vmatprep.subr.mxu0 0.0
    %1882 = vmatpush1.msra.mxu0 0.0
    %1883 = vmatprep.subr.mxu0 0.0
    %1884 = vmatpush1.msra.mxu0 0.0
    %1885 = vmatprep.subr.mxu0 0.0
    %1886 = vmatpush1.msra.mxu0 %v1856
    %1887 = vmatprep.subr.mxu0 0.0
    %1888 = vmatpush1.msra.mxu0 %v1855
    %1889 = vmatprep.subr.mxu0 0.0
    %1890 = vmatpush1.msra.mxu0 %v1854
    %1891 = vmatprep.subr.mxu0 0.0
    %1892 = vmatpush1.msra.mxu0 %v1853
    %1893 = vmatprep.subr.mxu0 0.0
    %1894 = vmatpush1.msra.mxu0 %v1852
    %1895 = vmatprep.subr.mxu0 0.0
    %1896 = vmatpush1.msra.mxu0 %v1851
    %1897 = vmatprep.subr.mxu0 0.0
    %1898 = vmatpush1.msra.mxu0 %v1850
    %1899 = vmatprep.subr.mxu0 0.0
    %1900 = vmatpush1.msra.mxu0 %v1849
    %1901 = vmatprep.subr.mxu0 0.0
    %1902 = vmatpush2.msra.mxu0 0.0
    %1903 = vmatprep.subr.mxu0 0.0
    %1904 = vmatpush2.msra.mxu0 0.0
    %1905 = vmatprep.subr.mxu0 0.0
    %1906 = vmatpush2.msra.mxu0 0.0
    %1907 = vmatprep.subr.mxu0 0.0
    %1908 = vmatpush2.msra.mxu0 0.0
    %1909 = vmatprep.subr.mxu0 0.0
    %1910 = vmatpush2.msra.mxu0 0.0
    %1911 = vmatprep.subr.mxu0 0.0
    %1912 = vmatpush2.msra.mxu0 0.0
    %1913 = vmatprep.subr.mxu0 0.0
    %1914 = vmatpush2.msra.mxu0 0.0
    %1915 = vmatprep.subr.mxu0 0.0
    %1916 = vmatpush2.msra.mxu0 0.0
    %1917 = vmatprep.subr.mxu0 0.0
    %1918 = vmatpush2.msra.mxu0 0.0
    %1919 = vmatprep.subr.mxu0 0.0
    %1920 = vmatpush2.msra.mxu0 0.0
    %1921 = vmatprep.subr.mxu0 0.0
    %1922 = vmatpush2.msra.mxu0 0.0
    %1923 = vmatprep.subr.mxu0 0.0
    %1924 = vmatpush2.msra.mxu0 0.0
    %1925 = vmatprep.subr.mxu0 0.0
    %1926 = vmatpush2.msra.mxu0 0.0
    %1927 = vmatprep.subr.mxu0 0.0
    %1928 = vmatpush2.msra.mxu0 0.0
    %1929 = vmatprep.subr.mxu0 0.0
    %1930 = vmatpush2.msra.mxu0 0.0
    %1931 = vmatprep.subr.mxu0 0.0
    %1932 = vmatpush2.msra.mxu0 0.0
    %1933 = vmatprep.mubr.f32.mxu0 0.0
    %1934 = vmatmul.mubr.f32.gmra.mxu0 %v1867
    %v1935 = vpop.f32.mrf.mxu0
    %v1936 = vadd.f32 %v1862, %v1935
    %v1937 = vpop.f32.mrf.mxu0
    %1938 = vdwg.mxu0
    %1939 = vst [vmem:[%s8] sm:$0xff] %v1936
    // Predicated region
    $region46: #{lstm_classifier_forward.1} parent=1 // pred_check
      _
    $region47: #{lstm_classifier_forward.1} parent=1 // pred_check_branch
      %1941 = sbr.rel (0) target = $region49
    $region48: #{lstm_classifier_forward.1} parent=1 // pred_region
      _
    $region49: #{lstm_classifier_forward.1} parent=1 // pred_fallthru
      _
    // Predicated region
    $region50: #{lstm_classifier_forward.1} parent=1 // pred_check
      _
    $region51: #{lstm_classifier_forward.1} parent=1 // pred_check_branch
      %1943 = sbr.rel (0) target = $region53
    $region52: #{lstm_classifier_forward.1} parent=1 // pred_region
      _
    $region53: #{lstm_classifier_forward.1} parent=1 // pred_fallthru
      _
    %1944 = vsyncpa [#allocation4], 1
    %1945 = vsyncpa [#allocation6], 1

</llo_original>
